<compile_context>
chip_gen: v5e
topology: v5e:2x2
jax: 0.10.0
libtpu: 0.0.40
codegen_flags: <defaults>
</compile_context>

<pallas_src>
import functools

import jax
import jax.numpy as jnp
import numpy as np
from jax.experimental import pallas as pl
from jax.experimental.pallas import tpu as pltpu


def _dwconv_bn_relu_kernel(x_ref, w_ref, b_ref, o_ref, xp_ref, *,
                           stride, H, W, Ho, Wo):
    # x_ref : (1, H, W, C)    input slab (NHWC, C on lanes), storage dtype
    # w_ref : (9, C)          3x3 taps with BN scale folded in (f32)
    # b_ref : (1, C)          folded BN bias (f32)
    # o_ref : (1, Ho, Wo, C)  output slab
    # xp_ref: (H+2, W+2, C)   f32 VMEM scratch holding the zero-padded plane
    C = o_ref.shape[-1]

    # Build the zero-padded input in VMEM (halo handled here; no HBM pad pass).
    xp_ref[...] = jnp.zeros_like(xp_ref)
    xp_ref[1:H + 1, 1:W + 1, :] = x_ref[0].astype(jnp.float32)
    xp = xp_ref[...]

    acc = jnp.zeros((Ho, Wo, C), jnp.float32)
    for ki in range(3):
        for kj in range(3):
            patch = jax.lax.slice(
                xp,
                (ki, kj, 0),
                (ki + stride * (Ho - 1) + 1, kj + stride * (Wo - 1) + 1, C),
                (stride, stride, 1),
            )
            tap = w_ref[ki * 3 + kj][None, None, :]   # (1, 1, C) per-lane tap
            acc = acc + tap * patch
    y = jnp.maximum(acc + b_ref[0][None, None, :], 0.0)
    o_ref[0] = y.astype(o_ref.dtype)


def _pick_cblk(Cout, per_channel_bytes):
    """Largest lane-dense (multiple-of-128) channel block dividing Cout that
    keeps the per-step working set well inside VMEM (v7x has 64 MiB)."""
    if Cout % 128 != 0:
        return Cout                      # small / ragged channel counts
    budget = 8 * 1024 * 1024             # conservative per-step budget
    blk = 128
    while (Cout % (blk * 2) == 0 and blk * 2 <= 512
           and (blk * 2) * per_channel_bytes <= budget):
        blk *= 2
    return blk


def dwconv_bn_relu(x, weight, gamma, beta, running_mean, running_var,
                   *, stride=1, eps=1e-5):
    """x: (N, Cin, H, W); weight: (Cout, 1, 3, 3) with groups = Cin."""
    N, Cin, H, W = x.shape
    Cout = weight.shape[0]
    assert Cout % Cin == 0, "groups=dw_channels requires Cout % Cin == 0"
    mult = Cout // Cin

    Ho = (H + 2 - 3) // stride + 1
    Wo = (W + 2 - 3) // stride + 1

    # Fold BatchNorm (inference): scale goes into the filter taps, bias stays.
    scale = (gamma.astype(jnp.float32)
             / jnp.sqrt(running_var.astype(jnp.float32) + eps))
    bias = beta.astype(jnp.float32) - running_mean.astype(jnp.float32) * scale

    # (Cout, 1, 3, 3) -> (9, Cout) with BN scale folded in; tap t = ki*3 + kj.
    w = (weight.reshape(Cout, 9).astype(jnp.float32) * scale[:, None]).T
    b = bias.reshape(1, Cout)

    # Channel-last: channels on the 128-lane axis.
    x_nhwc = jnp.transpose(x, (0, 2, 3, 1))
    if mult > 1:
        # grouped conv with out_channels > dw_channels: replicate input
        # channels so output lane c reads input lane c (== c // mult original).
        x_nhwc = jnp.repeat(x_nhwc, mult, axis=-1)

    itemsize = x.dtype.itemsize
    per_channel_bytes = (2 * H * W * itemsize          # double-buffered input
                         + 2 * Ho * Wo * itemsize      # double-buffered output
                         + (H + 2) * (W + 2) * 4)      # f32 padded scratch
    c_blk = _pick_cblk(Cout, per_channel_bytes)

    vmem_limit = int(min(max(2 * c_blk * per_channel_bytes, 8 * 1024 * 1024),
                         48 * 1024 * 1024))

    kernel = functools.partial(_dwconv_bn_relu_kernel,
                               stride=stride, H=H, W=W, Ho=Ho, Wo=Wo)

    out_nhwc = pl.pallas_call(
        kernel,
        out_shape=jax.ShapeDtypeStruct((N, Ho, Wo, Cout), x.dtype),
        grid=(N, Cout // c_blk),
        in_specs=[
            # (1, H, W, Cblk) input slab; W and Cblk are full-dim or lane-dense
            pl.BlockSpec((1, H, W, c_blk), lambda n, c: (n, 0, 0, c)),
            # folded 3x3 taps, one length-C lane vector per tap
            pl.BlockSpec((9, c_blk), lambda n, c: (0, c)),
            # folded BN bias
            pl.BlockSpec((1, c_blk), lambda n, c: (0, c)),
        ],
        out_specs=pl.BlockSpec((1, Ho, Wo, c_blk), lambda n, c: (n, 0, 0, c)),
        scratch_shapes=[pltpu.VMEM((H + 2, W + 2, c_blk), jnp.float32)],
        compiler_params=pltpu.CompilerParams(
            dimension_semantics=("parallel", "parallel"),
            vmem_limit_bytes=vmem_limit),
    )(x_nhwc, w, b)

    return jnp.transpose(out_nhwc, (0, 3, 1, 2))


def _reference(x, weight, gamma, beta, running_mean, running_var,
               *, stride=1, eps=1e-5):
    y = jax.lax.conv_general_dilated(
        x, weight,
        window_strides=(stride, stride),
        padding=((1, 1), (1, 1)),
        feature_group_count=x.shape[1],
        dimension_numbers=("NCHW", "OIHW", "NCHW"),
    )
    scale = gamma / jnp.sqrt(running_var + eps)
    bias = beta - running_mean * scale
    y = y * scale[None, :, None, None] + bias[None, :, None, None]
    return jnp.maximum(y, 0.0)


if __name__ == "__main__":
    # _DWConv(dw_channels=4, out_channels=4, stride=1)
    N, C, H, W = 2, 4, 16, 16
    out_channels, stride = C, 1

    key = jax.random.PRNGKey(0)
    kx, kw, kg, kb, km, kv = jax.random.split(key, 6)

    x = jax.random.normal(kx, (N, C, H, W), dtype=jnp.float32)
    weight = jax.random.normal(kw, (out_channels, 1, 3, 3), dtype=jnp.float32) * 0.1
    gamma = jax.random.normal(kg, (out_channels,), dtype=jnp.float32) * 0.1 + 1.0
    beta = jax.random.normal(kb, (out_channels,), dtype=jnp.float32) * 0.1
    running_mean = jax.random.normal(km, (out_channels,), dtype=jnp.float32) * 0.1
    running_var = jnp.abs(jax.random.normal(kv, (out_channels,), dtype=jnp.float32)) + 0.5

    out = dwconv_bn_relu(x, weight, gamma, beta, running_mean, running_var,
                         stride=stride)
    out = jax.block_until_ready(out)

    ref = _reference(x, weight, gamma, beta, running_mean, running_var,
                     stride=stride)
    np.testing.assert_allclose(np.asarray(out), np.asarray(ref),
                               rtol=1e-4, atol=1e-4)
    print("KERNEL_OK")
</pallas_src>

<mosaic_0001>
module attributes {stable_mosaic.version = 11 : i64} {
  func.func @_dwconv_bn_relu_kernel(%arg0: i32, %arg1: i32, %arg2: memref<1x16x16x4xf32, #tpu.memory_space<vmem>>, %arg3: memref<9x4xf32, #tpu.memory_space<vmem>>, %arg4: memref<1x4xf32, #tpu.memory_space<vmem>>, %arg5: memref<1x16x16x4xf32, #tpu.memory_space<vmem>>, %arg6: memref<18x18x4xf32, #tpu.memory_space<vmem>>) attributes {dimension_semantics = [#tpu.dimension_semantics<parallel>, #tpu.dimension_semantics<parallel>], iteration_bounds = array<i64: 2, 1>, scalar_prefetch = 0 : i64, scratch_operands = 1 : i64, tpu.core_type = #tpu.core_type<tc>, window_params = [{transform_indices = @transform_0, window_bounds = array<i64: 1, 16, 16, 4>}, {transform_indices = @transform_1, window_bounds = array<i64: 9, 4>}, {transform_indices = @transform_2, window_bounds = array<i64: 1, 4>}, {transform_indices = @transform_3, window_bounds = array<i64: 1, 16, 16, 4>}]} {
    %cst = arith.constant 0.000000e+00 : f32
    %0 = vector.broadcast %cst : f32 to vector<18x18x4xf32>
    %c0 = arith.constant 0 : index
    %c0_0 = arith.constant 0 : index
    %c0_1 = arith.constant 0 : index
    %1 = vector.load %arg6[%c0, %c0_0, %c0_1] : memref<18x18x4xf32, #tpu.memory_space<vmem>>, vector<18x18x4xf32>
    tpu.vector_store %arg6[%c0, %c0_0, %c0_1], %0 {strides = array<i32>} : memref<18x18x4xf32, #tpu.memory_space<vmem>>, vector<18x18x4xf32>,
    %c0_2 = arith.constant 0 : index
    %c0_3 = arith.constant 0 : index
    %c0_4 = arith.constant 0 : index
    %c0_5 = arith.constant 0 : index
    %2 = vector.load %arg2[%c0_2, %c0_3, %c0_4, %c0_5] : memref<1x16x16x4xf32, #tpu.memory_space<vmem>>, vector<1x16x16x4xf32>
    %3 = vector.shape_cast %2 : vector<1x16x16x4xf32> to vector<16x16x4xf32>
    %c1 = arith.constant 1 : index
    %c1_6 = arith.constant 1 : index
    %c0_7 = arith.constant 0 : index
    %4 = vector.load %arg6[%c1, %c1_6, %c0_7] : memref<18x18x4xf32, #tpu.memory_space<vmem>>, vector<16x16x4xf32>
    tpu.vector_store %arg6[%c1, %c1_6, %c0_7], %3 {strides = array<i32>} : memref<18x18x4xf32, #tpu.memory_space<vmem>>, vector<16x16x4xf32>,
    %c0_8 = arith.constant 0 : index
    %c0_9 = arith.constant 0 : index
    %c0_10 = arith.constant 0 : index
    %5 = vector.load %arg6[%c0_8, %c0_9, %c0_10] : memref<18x18x4xf32, #tpu.memory_space<vmem>>, vector<18x18x4xf32>
    %cst_11 = arith.constant 0.000000e+00 : f32
    %6 = vector.broadcast %cst_11 : f32 to vector<16x16x4xf32>
    %7 = vector.extract_strided_slice %5 {offsets = [0, 0, 0], sizes = [16, 16, 4], strides = [1, 1, 1]} : vector<18x18x4xf32> to vector<16x16x4xf32>
    %c0_12 = arith.constant 0 : index
    %c0_13 = arith.constant 0 : index
    %8 = vector.load %arg3[%c0_12, %c0_13] : memref<9x4xf32, #tpu.memory_space<vmem>>, vector<1x4xf32>
    %9 = vector.shape_cast %8 : vector<1x4xf32> to vector<4xf32>
    %10 = vector.shape_cast %9 : vector<4xf32> to vector<1x1x4xf32>
    %11 = vector.broadcast %10 : vector<1x1x4xf32> to vector<16x16x4xf32>
    %12 = arith.mulf %11, %7 : vector<16x16x4xf32>
    %13 = arith.addf %6, %12 : vector<16x16x4xf32>
    %14 = vector.extract_strided_slice %5 {offsets = [0, 1, 0], sizes = [16, 16, 4], strides = [1, 1, 1]} : vector<18x18x4xf32> to vector<16x16x4xf32>
    %c1_14 = arith.constant 1 : index
    %c0_15 = arith.constant 0 : index
    %15 = vector.load %arg3[%c1_14, %c0_15] : memref<9x4xf32, #tpu.memory_space<vmem>>, vector<1x4xf32>
    %16 = vector.shape_cast %15 : vector<1x4xf32> to vector<4xf32>
    %17 = vector.shape_cast %16 : vector<4xf32> to vector<1x1x4xf32>
    %18 = vector.broadcast %17 : vector<1x1x4xf32> to vector<16x16x4xf32>
    %19 = arith.mulf %18, %14 : vector<16x16x4xf32>
    %20 = arith.addf %13, %19 : vector<16x16x4xf32>
    %21 = vector.extract_strided_slice %5 {offsets = [0, 2, 0], sizes = [16, 16, 4], strides = [1, 1, 1]} : vector<18x18x4xf32> to vector<16x16x4xf32>
    %c2 = arith.constant 2 : index
    %c0_16 = arith.constant 0 : index
    %22 = vector.load %arg3[%c2, %c0_16] : memref<9x4xf32, #tpu.memory_space<vmem>>, vector<1x4xf32>
    %23 = vector.shape_cast %22 : vector<1x4xf32> to vector<4xf32>
    %24 = vector.shape_cast %23 : vector<4xf32> to vector<1x1x4xf32>
    %25 = vector.broadcast %24 : vector<1x1x4xf32> to vector<16x16x4xf32>
    %26 = arith.mulf %25, %21 : vector<16x16x4xf32>
    %27 = arith.addf %20, %26 : vector<16x16x4xf32>
    %28 = vector.extract_strided_slice %5 {offsets = [1, 0, 0], sizes = [16, 16, 4], strides = [1, 1, 1]} : vector<18x18x4xf32> to vector<16x16x4xf32>
    %c3 = arith.constant 3 : index
    %c0_17 = arith.constant 0 : index
    %29 = vector.load %arg3[%c3, %c0_17] : memref<9x4xf32, #tpu.memory_space<vmem>>, vector<1x4xf32>
    %30 = vector.shape_cast %29 : vector<1x4xf32> to vector<4xf32>
    %31 = vector.shape_cast %30 : vector<4xf32> to vector<1x1x4xf32>
    %32 = vector.broadcast %31 : vector<1x1x4xf32> to vector<16x16x4xf32>
    %33 = arith.mulf %32, %28 : vector<16x16x4xf32>
    %34 = arith.addf %27, %33 : vector<16x16x4xf32>
    %35 = vector.extract_strided_slice %5 {offsets = [1, 1, 0], sizes = [16, 16, 4], strides = [1, 1, 1]} : vector<18x18x4xf32> to vector<16x16x4xf32>
    %c4 = arith.constant 4 : index
    %c0_18 = arith.constant 0 : index
    %36 = vector.load %arg3[%c4, %c0_18] : memref<9x4xf32, #tpu.memory_space<vmem>>, vector<1x4xf32>
    %37 = vector.shape_cast %36 : vector<1x4xf32> to vector<4xf32>
    %38 = vector.shape_cast %37 : vector<4xf32> to vector<1x1x4xf32>
    %39 = vector.broadcast %38 : vector<1x1x4xf32> to vector<16x16x4xf32>
    %40 = arith.mulf %39, %35 : vector<16x16x4xf32>
    %41 = arith.addf %34, %40 : vector<16x16x4xf32>
    %42 = vector.extract_strided_slice %5 {offsets = [1, 2, 0], sizes = [16, 16, 4], strides = [1, 1, 1]} : vector<18x18x4xf32> to vector<16x16x4xf32>
    %c5 = arith.constant 5 : index
    %c0_19 = arith.constant 0 : index
    %43 = vector.load %arg3[%c5, %c0_19] : memref<9x4xf32, #tpu.memory_space<vmem>>, vector<1x4xf32>
    %44 = vector.shape_cast %43 : vector<1x4xf32> to vector<4xf32>
    %45 = vector.shape_cast %44 : vector<4xf32> to vector<1x1x4xf32>
    %46 = vector.broadcast %45 : vector<1x1x4xf32> to vector<16x16x4xf32>
    %47 = arith.mulf %46, %42 : vector<16x16x4xf32>
    %48 = arith.addf %41, %47 : vector<16x16x4xf32>
    %49 = vector.extract_strided_slice %5 {offsets = [2, 0, 0], sizes = [16, 16, 4], strides = [1, 1, 1]} : vector<18x18x4xf32> to vector<16x16x4xf32>
    %c6 = arith.constant 6 : index
    %c0_20 = arith.constant 0 : index
    %50 = vector.load %arg3[%c6, %c0_20] : memref<9x4xf32, #tpu.memory_space<vmem>>, vector<1x4xf32>
    %51 = vector.shape_cast %50 : vector<1x4xf32> to vector<4xf32>
    %52 = vector.shape_cast %51 : vector<4xf32> to vector<1x1x4xf32>
    %53 = vector.broadcast %52 : vector<1x1x4xf32> to vector<16x16x4xf32>
    %54 = arith.mulf %53, %49 : vector<16x16x4xf32>
    %55 = arith.addf %48, %54 : vector<16x16x4xf32>
    %56 = vector.extract_strided_slice %5 {offsets = [2, 1, 0], sizes = [16, 16, 4], strides = [1, 1, 1]} : vector<18x18x4xf32> to vector<16x16x4xf32>
    %c7 = arith.constant 7 : index
    %c0_21 = arith.constant 0 : index
    %57 = vector.load %arg3[%c7, %c0_21] : memref<9x4xf32, #tpu.memory_space<vmem>>, vector<1x4xf32>
    %58 = vector.shape_cast %57 : vector<1x4xf32> to vector<4xf32>
    %59 = vector.shape_cast %58 : vector<4xf32> to vector<1x1x4xf32>
    %60 = vector.broadcast %59 : vector<1x1x4xf32> to vector<16x16x4xf32>
    %61 = arith.mulf %60, %56 : vector<16x16x4xf32>
    %62 = arith.addf %55, %61 : vector<16x16x4xf32>
    %63 = vector.extract_strided_slice %5 {offsets = [2, 2, 0], sizes = [16, 16, 4], strides = [1, 1, 1]} : vector<18x18x4xf32> to vector<16x16x4xf32>
    %c8 = arith.constant 8 : index
    %c0_22 = arith.constant 0 : index
    %64 = vector.load %arg3[%c8, %c0_22] : memref<9x4xf32, #tpu.memory_space<vmem>>, vector<1x4xf32>
    %65 = vector.shape_cast %64 : vector<1x4xf32> to vector<4xf32>
    %66 = vector.shape_cast %65 : vector<4xf32> to vector<1x1x4xf32>
    %67 = vector.broadcast %66 : vector<1x1x4xf32> to vector<16x16x4xf32>
    %68 = arith.mulf %67, %63 : vector<16x16x4xf32>
    %69 = arith.addf %62, %68 : vector<16x16x4xf32>
    %c0_23 = arith.constant 0 : index
    %c0_24 = arith.constant 0 : index
    %70 = vector.load %arg4[%c0_23, %c0_24] : memref<1x4xf32, #tpu.memory_space<vmem>>, vector<1x4xf32>
    %71 = vector.shape_cast %70 : vector<1x4xf32> to vector<4xf32>
    %72 = vector.shape_cast %71 : vector<4xf32> to vector<1x1x4xf32>
    %73 = vector.broadcast %72 : vector<1x1x4xf32> to vector<16x16x4xf32>
    %74 = arith.addf %69, %73 : vector<16x16x4xf32>
    %cst_25 = arith.constant 0.000000e+00 : f32
    %75 = vector.broadcast %cst_25 : f32 to vector<16x16x4xf32>
    %76 = arith.maximumf %74, %75 : vector<16x16x4xf32>
    %c0_26 = arith.constant 0 : index
    %c0_27 = arith.constant 0 : index
    %c0_28 = arith.constant 0 : index
    %c0_29 = arith.constant 0 : index
    %77 = vector.load %arg5[%c0_26, %c0_27, %c0_28, %c0_29] : memref<1x16x16x4xf32, #tpu.memory_space<vmem>>, vector<1x16x16x4xf32>
    %78 = vector.shape_cast %77 : vector<1x16x16x4xf32> to vector<16x16x4xf32>
    %79 = vector.shape_cast %76 : vector<16x16x4xf32> to vector<1x16x16x4xf32>
    tpu.vector_store %arg5[%c0_26, %c0_27, %c0_28, %c0_29], %79 {strides = array<i32>} : memref<1x16x16x4xf32, #tpu.memory_space<vmem>>, vector<1x16x16x4xf32>,
    return
  }
  func.func @transform_0(%arg0: i32, %arg1: i32) -> (i32, i32, i32, i32) {
    %c0_i32 = arith.constant 0 : i32
    %c0_i32_0 = arith.constant 0 : i32
    %c0_i32_1 = arith.constant 0 : i32
    return %arg0, %c0_i32, %c0_i32_0, %arg1 : i32, i32, i32, i32
  }
  func.func @transform_1(%arg0: i32, %arg1: i32) -> (i32, i32) {
    %c0_i32 = arith.constant 0 : i32
    %c0_i32_0 = arith.constant 0 : i32
    return %c0_i32, %arg1 : i32, i32
  }
  func.func @transform_2(%arg0: i32, %arg1: i32) -> (i32, i32) {
    %c0_i32 = arith.constant 0 : i32
    %c0_i32_0 = arith.constant 0 : i32
    return %c0_i32, %arg1 : i32, i32
  }
  func.func @transform_3(%arg0: i32, %arg1: i32) -> (i32, i32, i32, i32) {
    %c0_i32 = arith.constant 0 : i32
    %c0_i32_0 = arith.constant 0 : i32
    %c0_i32_1 = arith.constant 0 : i32
    return %arg0, %c0_i32, %c0_i32_0, %arg1 : i32, i32, i32, i32
  }
}

</mosaic_0001>

<llo_original>
// kernel: tpu_custom_call.1
$region0: #{tpu_custom_call.1}
  #allocation0 [shape = 'u32[]', space=smem, size = 0x4, offset = 0x4, fixed_abs, tag = 'smem constant byte address 0x4 - core index']
  #allocation1 [shape = 'u32[72,128]{1,0:T(1,128)}', space=vmem, size = 0x9000, scoped, tag = 'internal scratch']
  #allocation2 [shape = 'f32[18,18,4]{2,1,0:T(8,128)}', space=vmem, size = 0x36000, scoped, tag = 'scratch operand']
  %s0 = inlined_call_operand.vmem [shape: f32[2,16,16,4], index: 0, kind: input, shape index: {}]
  %s1 = inlined_call_operand.vmem [shape: f32[9,4], index: 1, kind: input, shape index: {}]
  %s2 = inlined_call_operand.vmem [shape: f32[1,4], index: 2, kind: input, shape index: {}]
  %s3 = inlined_call_operand.vmem [shape: f32[2,16,16,4], index: 3, kind: output, shape index: {}]
  %s4 = sld [smem:[#allocation0]]
  $region45: #{tpu_custom_call.1} parent=0
    _
  %s6 = ssub.s32 1, %s4
  %s7 = scalar_select 0, %s6, %s4
  loop: start=0, step=1, limit=4
  $region2: #{tpu_custom_call.1} parent=0 // loop_pre_header
    _
  $region3: #{tpu_custom_call.1} parent=0 // loop_header
    %s9 = sphi 0, %s13
    %p10 = scmp.ge.s32.totalorder %s9, 4
    %s16 = sphi 0, %s28
    %s17 = sphi 0, %s24
    %s18 = sphi 0, %s16
    %s19 = sphi 0, %s17
    %s20 = sphi 0, %s18
    %s21 = sphi 0, %s19
    %s33 = sphi 0, %s35
    %s36 = sphi 0, %s33
    %s37 = sphi 0, %s36
    %s53 = sphi 0, %s37
    %s59 = sphi 0, %s61
    %s62 = sphi 0, %s59
    %s63 = sphi 0, %s62
    %s79 = sphi 0, %s63
    %s85 = sphi 0, %s87
    %s88 = sphi 0, %s85
    %s89 = sphi 0, %s88
    %s105 = sphi 0, %s89
    %s113 = sphi 0, %s115
    %s116 = sphi 0, %s113
    %s117 = sphi 0, %s116
    %s133 = sphi 0, %s117
  $region4: #{tpu_custom_call.1} parent=0 // loop_header_branch
    %12 = sbr.rel (%p10) target = $region8
  $region5: #{tpu_custom_call.1} parent=0 // loop_body
    %s14 = ssub.s32 %s9, 1
    %s15 = ssub.s32 %s9, 2
    %s22 = sadd.s32 1, %s17
    %p23 = scmp.ge.s32.totalorder %s22, 1
    %s24 = scalar_select %p23, 0, %s22
    %s25 = sadd.s32 1, %s16
    %s26 = scalar_select %p23, %s25, %s16
    %p27 = scmp.ge.s32.totalorder %s26, 2
    %s28 = scalar_select %p27, 0, %s26
    %s29 = ssub.s32 %s16, %s28
    %s30 = ssub.s32 %s17, %s24
    %s31 = sor.u32 %s29, %s30
    %p32 = scmp.eq.s32.totalorder %s31, 0
    %s34 = sadd.s32 %s33, 1
    %s35 = scalar_select %p32, %s33, %s34
    %p38 = pneg %p32
    %p39 = scmp.eq.s32.totalorder %s9, 1
    %p40 = por %p38, %p39
    %p41 = scmp.ne.s32.totalorder %s33, %s36
    %p42 = scmp.eq.s32.totalorder %s9, 0
    %p43 = por %p41, %p42
    %p44 = scmp.ne.s32.totalorder %s33, %s36
    %p45 = scmp.eq.s32.totalorder %s14, 1
    %p46 = por %p44, %p45
    %p47 = scmp.ne.s32.totalorder %s36, %s37
    %p48 = scmp.eq.s32.totalorder %s14, 0
    %p49 = por %p47, %p48
    %p50 = scmp.ne.s32.totalorder %s36, %s37
    %p51 = scmp.eq.s32.totalorder %s15, 1
    %p52 = por %p50, %p51
    %p54 = scmp.ne.s32.totalorder %s37, %s53
    %p55 = scmp.eq.s32.totalorder %s15, 0
    %p56 = por %p54, %p55
    %s57 = ssub.s32 %s17, %s24
    %p58 = scmp.eq.s32.totalorder %s57, 0
    %s60 = sadd.s32 %s59, 1
    %s61 = scalar_select %p58, %s59, %s60
    %p64 = pneg %p58
    %p65 = scmp.eq.s32.totalorder %s9, 1
    %p66 = por %p64, %p65
    %p67 = scmp.ne.s32.totalorder %s59, %s62
    %p68 = scmp.eq.s32.totalorder %s9, 0
    %p69 = por %p67, %p68
    %p70 = scmp.ne.s32.totalorder %s59, %s62
    %p71 = scmp.eq.s32.totalorder %s14, 1
    %p72 = por %p70, %p71
    %p73 = scmp.ne.s32.totalorder %s62, %s63
    %p74 = scmp.eq.s32.totalorder %s14, 0
    %p75 = por %p73, %p74
    %p76 = scmp.ne.s32.totalorder %s62, %s63
    %p77 = scmp.eq.s32.totalorder %s15, 1
    %p78 = por %p76, %p77
    %p80 = scmp.ne.s32.totalorder %s63, %s79
    %p81 = scmp.eq.s32.totalorder %s15, 0
    %p82 = por %p80, %p81
    %s83 = ssub.s32 %s17, %s24
    %p84 = scmp.eq.s32.totalorder %s83, 0
    %s86 = sadd.s32 %s85, 1
    %s87 = scalar_select %p84, %s85, %s86
    %p90 = pneg %p84
    %p91 = scmp.eq.s32.totalorder %s9, 1
    %p92 = por %p90, %p91
    %p93 = scmp.ne.s32.totalorder %s85, %s88
    %p94 = scmp.eq.s32.totalorder %s9, 0
    %p95 = por %p93, %p94
    %p96 = scmp.ne.s32.totalorder %s85, %s88
    %p97 = scmp.eq.s32.totalorder %s14, 1
    %p98 = por %p96, %p97
    %p99 = scmp.ne.s32.totalorder %s88, %s89
    %p100 = scmp.eq.s32.totalorder %s14, 0
    %p101 = por %p99, %p100
    %p102 = scmp.ne.s32.totalorder %s88, %s89
    %p103 = scmp.eq.s32.totalorder %s15, 1
    %p104 = por %p102, %p103
    %p106 = scmp.ne.s32.totalorder %s89, %s105
    %p107 = scmp.eq.s32.totalorder %s15, 0
    %p108 = por %p106, %p107
    %s109 = ssub.s32 %s16, %s28
    %s110 = ssub.s32 %s17, %s24
    %s111 = sor.u32 %s109, %s110
    %p112 = scmp.eq.s32.totalorder %s111, 0
    %s114 = sadd.s32 %s113, 1
    %s115 = scalar_select %p112, %s113, %s114
    %p118 = pneg %p112
    %p119 = scmp.eq.s32.totalorder %s9, 1
    %p120 = por %p118, %p119
    %p121 = scmp.ne.s32.totalorder %s113, %s116
    %p122 = scmp.eq.s32.totalorder %s9, 0
    %p123 = por %p121, %p122
    %p124 = scmp.ne.s32.totalorder %s113, %s116
    %p125 = scmp.eq.s32.totalorder %s14, 1
    %p126 = por %p124, %p125
    %p127 = scmp.ne.s32.totalorder %s116, %s117
    %p128 = scmp.eq.s32.totalorder %s14, 0
    %p129 = por %p127, %p128
    %p130 = scmp.ne.s32.totalorder %s116, %s117
    %p131 = scmp.eq.s32.totalorder %s15, 1
    %p132 = por %p130, %p131
    %p134 = scmp.ne.s32.totalorder %s117, %s133
    %p135 = scmp.eq.s32.totalorder %s15, 0
    %p136 = por %p134, %p135
    %p137 = scmp.le.s32.totalorder 1, %s9
    %p138 = scmp.lt.s32.totalorder %s9, 3
    %p139 = pnand %p137, %p138
    %p140 = pneg %p139
    // Predicated region
    $region9: #{tpu_custom_call.1} parent=5 // pred_check
      _
    $region10: #{tpu_custom_call.1} parent=5 // pred_check_branch
      %142 = sbr.rel (%p139) target = $region12
    $region11: #{tpu_custom_call.1} parent=5 // pred_region
      %s143 = ssub.s32 %s9, 1
      // Predicated region
      $region13: #{tpu_custom_call.1} parent=11 // pred_check
        %p144 = pneg %p75
      $region14: #{tpu_custom_call.1} parent=11 // pred_check_branch
        %146 = sbr.rel (%p144) target = $region16
      $region15: #{tpu_custom_call.1} parent=11 // pred_region
        %p147 = scmp.lt.s32.totalorder %s19, 0
        %s148 = scalar_select %p147, %s19, 0
        %s149 = smul.addr %s148, 8
        %s150 = scalar_lea.vmem %s1, %s149
      $region16: #{tpu_custom_call.1} parent=11 // pred_fallthru
        _
      // Predicated region
      $region17: #{tpu_custom_call.1} parent=11 // pred_check
        %p151 = pneg %p101
      $region18: #{tpu_custom_call.1} parent=11 // pred_check_branch
        %153 = sbr.rel (%p151) target = $region20
      $region19: #{tpu_custom_call.1} parent=11 // pred_region
        %p154 = scmp.lt.s32.totalorder %s19, 0
        %s155 = scalar_select %p154, %s19, 0
        %s156 = scalar_lea.vmem %s2, %s155
      $region20: #{tpu_custom_call.1} parent=11 // pred_fallthru
        _
    $region12: #{tpu_custom_call.1} parent=5 // pred_fallthru
      _
    %p157 = scmp.lt.s32.totalorder %s9, 2
    // Predicated region
    $region21: #{tpu_custom_call.1} parent=5 // pred_check
      %p158 = pneg %p157
    $region22: #{tpu_custom_call.1} parent=5 // pred_check_branch
      %160 = sbr.rel (%p158) target = $region24
    $region23: #{tpu_custom_call.1} parent=5 // pred_region
      // Predicated region
      $region25: #{tpu_custom_call.1} parent=23 // pred_check
        %p161 = pneg %p43
      $region26: #{tpu_custom_call.1} parent=23 // pred_check_branch
        %163 = sbr.rel (%p161) target = $region28
      $region27: #{tpu_custom_call.1} parent=23 // pred_region
        %p164 = scmp.lt.s32.totalorder %s16, 1
        %s165 = scalar_select %p164, %s16, 1
        %p166 = scmp.lt.s32.totalorder %s17, 0
        %s167 = scalar_select %p166, %s17, 0
        %s168 = smul.addr %s165, 32
        %s169 = sadd.s32 %s167, %s168
        %s170 = smul.addr %s169, 8
        %s171 = scalar_lea.vmem %s0, %s170
      $region28: #{tpu_custom_call.1} parent=23 // pred_fallthru
        _
    $region24: #{tpu_custom_call.1} parent=5 // pred_fallthru
      _
    %p172 = scmp.le.s32.totalorder 1, %s9
    %p173 = scmp.lt.s32.totalorder %s9, 3
    %p174 = pnand %p172, %p173
    %p175 = pneg %p174
    // Predicated region
    $region29: #{tpu_custom_call.1} parent=5 // pred_check
      _
    $region30: #{tpu_custom_call.1} parent=5 // pred_check_branch
      %177 = sbr.rel (%p174) target = $region32
    $region31: #{tpu_custom_call.1} parent=5 // pred_region
      %s178 = ssub.s32 %s9, 1
      %p179 = scmp.lt.s32.totalorder %s18, 1
      %s180 = scalar_select %p179, %s18, 1
      %p181 = scmp.lt.s32.totalorder %s19, 0
      %s182 = scalar_select %p181, %s19, 0
      %s183 = smul.addr %s180, 32
      %s184 = sadd.s32 %s182, %s183
      %s185 = smul.addr %s184, 8
      %s186 = scalar_lea.vmem %s0, %s185
      %p187 = pneg %p49
      %p188 = pneg %p46
      %p189 = scmp.lt.s32.totalorder %s19, 0
      %s190 = scalar_select %p189, %s19, 0
      %s191 = smul.addr %s190, 8
      %s192 = scalar_lea.vmem %s1, %s191
      %p193 = pneg %p75
      %p194 = pneg %p72
      %p195 = scmp.lt.s32.totalorder %s19, 0
      %s196 = scalar_select %p195, %s19, 0
      %s197 = scalar_lea.vmem %s2, %s196
      %p198 = pneg %p101
      %p199 = pneg %p98
      %p200 = pneg %p129
      %p201 = pneg %p126
      %p202 = scmp.lt.s32.totalorder %s18, 1
      %s203 = scalar_select %p202, %s18, 1
      %p204 = scmp.lt.s32.totalorder %s19, 0
      %s205 = scalar_select %p204, %s19, 0
      %s206 = smul.addr %s203, 32
      %s207 = sadd.s32 %s205, %s206
      %s208 = smul.addr %s207, 8
      %s209 = scalar_lea.vmem %s3, %s208
      %p210 = scmp.lt.s32.totalorder %s18, 1
      %s211 = scalar_select %p210, %s18, 1
      %p212 = scmp.lt.s32.totalorder %s19, 0
      %s213 = scalar_select %p212, %s19, 0
      %s214 = smul.addr %s211, 32
      %s215 = sadd.s32 %s213, %s214
      %s216 = smul.addr %s215, 8
      %s217 = scalar_lea.vmem %s0, %s216
      %p218 = scmp.lt.s32.totalorder %s19, 0
      %s219 = scalar_select %p218, %s19, 0
      %s220 = smul.addr %s219, 8
      %s221 = scalar_lea.vmem %s1, %s220
      %p222 = scmp.lt.s32.totalorder %s19, 0
      %s223 = scalar_select %p222, %s19, 0
      %s224 = scalar_lea.vmem %s2, %s223
      %p225 = scmp.lt.s32.totalorder %s18, 1
      %s226 = scalar_select %p225, %s18, 1
      %p227 = scmp.lt.s32.totalorder %s19, 0
      %s228 = scalar_select %p227, %s19, 0
      %s229 = smul.addr %s226, 32
      %s230 = sadd.s32 %s228, %s229
      %s231 = smul.addr %s230, 8
      %s232 = scalar_lea.vmem %s3, %s231
      %vm233 = vcmask 31744
      %234 = vst.msk [vmem:[#allocation2] sm:$0xff] %vm233, 0.0
      %235 = vst.msk [vmem:[#allocation2 + $0x8] sm:$0xff] %vm233, 0.0
      %vm236 = vcmask 25600
      %237 = vst.msk [vmem:[#allocation2 + $0x10] sm:$0x3] %vm236, 0.0
      %238 = vst.msk [vmem:[#allocation2 + $0x18] sm:$0xff] %vm233, 0.0
      %239 = vst.msk [vmem:[#allocation2 + $0x20] sm:$0xff] %vm233, 0.0
      %240 = vst.msk [vmem:[#allocation2 + $0x28] sm:$0x3] %vm236, 0.0
      %241 = vst.msk [vmem:[#allocation2 + $0x30] sm:$0xff] %vm233, 0.0
      %242 = vst.msk [vmem:[#allocation2 + $0x38] sm:$0xff] %vm233, 0.0
      %243 = vst.msk [vmem:[#allocation2 + $0x40] sm:$0x3] %vm236, 0.0
      %244 = vst.msk [vmem:[#allocation2 + $0x48] sm:$0xff] %vm233, 0.0
      %245 = vst.msk [vmem:[#allocation2 + $0x50] sm:$0xff] %vm233, 0.0
      %246 = vst.msk [vmem:[#allocation2 + $0x58] sm:$0x3] %vm236, 0.0
      %247 = vst.msk [vmem:[#allocation2 + $0x60] sm:$0xff] %vm233, 0.0
      %248 = vst.msk [vmem:[#allocation2 + $0x68] sm:$0xff] %vm233, 0.0
      %249 = vst.msk [vmem:[#allocation2 + $0x70] sm:$0x3] %vm236, 0.0
      %250 = vst.msk [vmem:[#allocation2 + $0x78] sm:$0xff] %vm233, 0.0
      %251 = vst.msk [vmem:[#allocation2 + $0x80] sm:$0xff] %vm233, 0.0
      %252 = vst.msk [vmem:[#allocation2 + $0x88] sm:$0x3] %vm236, 0.0
      %253 = vst.msk [vmem:[#allocation2 + $0x90] sm:$0xff] %vm233, 0.0
      %254 = vst.msk [vmem:[#allocation2 + $0x98] sm:$0xff] %vm233, 0.0
      %255 = vst.msk [vmem:[#allocation2 + $0xa0] sm:$0x3] %vm236, 0.0
      %256 = vst.msk [vmem:[#allocation2 + $0xa8] sm:$0xff] %vm233, 0.0
      %257 = vst.msk [vmem:[#allocation2 + $0xb0] sm:$0xff] %vm233, 0.0
      %258 = vst.msk [vmem:[#allocation2 + $0xb8] sm:$0x3] %vm236, 0.0
      %259 = vst.msk [vmem:[#allocation2 + $0xc0] sm:$0xff] %vm233, 0.0
      %260 = vst.msk [vmem:[#allocation2 + $0xc8] sm:$0xff] %vm233, 0.0
      %261 = vst.msk [vmem:[#allocation2 + $0xd0] sm:$0x3] %vm236, 0.0
      %262 = vst.msk [vmem:[#allocation2 + $0xd8] sm:$0xff] %vm233, 0.0
      %263 = vst.msk [vmem:[#allocation2 + $0xe0] sm:$0xff] %vm233, 0.0
      %264 = vst.msk [vmem:[#allocation2 + $0xe8] sm:$0x3] %vm236, 0.0
      %265 = vst.msk [vmem:[#allocation2 + $0xf0] sm:$0xff] %vm233, 0.0
      %266 = vst.msk [vmem:[#allocation2 + $0xf8] sm:$0xff] %vm233, 0.0
      %267 = vst.msk [vmem:[#allocation2 + $0x100] sm:$0x3] %vm236, 0.0
      %268 = vst.msk [vmem:[#allocation2 + $0x108] sm:$0xff] %vm233, 0.0
      %269 = vst.msk [vmem:[#allocation2 + $0x110] sm:$0xff] %vm233, 0.0
      %270 = vst.msk [vmem:[#allocation2 + $0x118] sm:$0x3] %vm236, 0.0
      %271 = vst.msk [vmem:[#allocation2 + $0x120] sm:$0xff] %vm233, 0.0
      %272 = vst.msk [vmem:[#allocation2 + $0x128] sm:$0xff] %vm233, 0.0
      %273 = vst.msk [vmem:[#allocation2 + $0x130] sm:$0x3] %vm236, 0.0
      %274 = vst.msk [vmem:[#allocation2 + $0x138] sm:$0xff] %vm233, 0.0
      %275 = vst.msk [vmem:[#allocation2 + $0x140] sm:$0xff] %vm233, 0.0
      %276 = vst.msk [vmem:[#allocation2 + $0x148] sm:$0x3] %vm236, 0.0
      %277 = vst.msk [vmem:[#allocation2 + $0x150] sm:$0xff] %vm233, 0.0
      %278 = vst.msk [vmem:[#allocation2 + $0x158] sm:$0xff] %vm233, 0.0
      %279 = vst.msk [vmem:[#allocation2 + $0x160] sm:$0x3] %vm236, 0.0
      %280 = vst.msk [vmem:[#allocation2 + $0x168] sm:$0xff] %vm233, 0.0
      %281 = vst.msk [vmem:[#allocation2 + $0x170] sm:$0xff] %vm233, 0.0
      %282 = vst.msk [vmem:[#allocation2 + $0x178] sm:$0x3] %vm236, 0.0
      %283 = vst.msk [vmem:[#allocation2 + $0x180] sm:$0xff] %vm233, 0.0
      %284 = vst.msk [vmem:[#allocation2 + $0x188] sm:$0xff] %vm233, 0.0
      %285 = vst.msk [vmem:[#allocation2 + $0x190] sm:$0x3] %vm236, 0.0
      %286 = vst.msk [vmem:[#allocation2 + $0x198] sm:$0xff] %vm233, 0.0
      %287 = vst.msk [vmem:[#allocation2 + $0x1a0] sm:$0xff] %vm233, 0.0
      %288 = vst.msk [vmem:[#allocation2 + $0x1a8] sm:$0x3] %vm236, 0.0
      %v289 = vld [vmem:[%s217] sm:$0xff]
      %v290 = vld [vmem:[%s217 + $0x8] sm:$0xff]
      %v291 = vld [vmem:[%s217 + $0x10] sm:$0xff]
      %v292 = vld [vmem:[%s217 + $0x18] sm:$0xff]
      %v293 = vld [vmem:[%s217 + $0x20] sm:$0xff]
      %v294 = vld [vmem:[%s217 + $0x28] sm:$0xff]
      %v295 = vld [vmem:[%s217 + $0x30] sm:$0xff]
      %v296 = vld [vmem:[%s217 + $0x38] sm:$0xff]
      %v297 = vld [vmem:[%s217 + $0x40] sm:$0xff]
      %v298 = vld [vmem:[%s217 + $0x48] sm:$0xff]
      %v299 = vld [vmem:[%s217 + $0x50] sm:$0xff]
      %v300 = vld [vmem:[%s217 + $0x58] sm:$0xff]
      %v301 = vld [vmem:[%s217 + $0x60] sm:$0xff]
      %v302 = vld [vmem:[%s217 + $0x68] sm:$0xff]
      %v303 = vld [vmem:[%s217 + $0x70] sm:$0xff]
      %v304 = vld [vmem:[%s217 + $0x78] sm:$0xff]
      %v305 = vld [vmem:[%s217 + $0x80] sm:$0xff]
      %v306 = vld [vmem:[%s217 + $0x88] sm:$0xff]
      %v307 = vld [vmem:[%s217 + $0x90] sm:$0xff]
      %v308 = vld [vmem:[%s217 + $0x98] sm:$0xff]
      %v309 = vld [vmem:[%s217 + $0xa0] sm:$0xff]
      %v310 = vld [vmem:[%s217 + $0xa8] sm:$0xff]
      %v311 = vld [vmem:[%s217 + $0xb0] sm:$0xff]
      %v312 = vld [vmem:[%s217 + $0xb8] sm:$0xff]
      %v313 = vld [vmem:[%s217 + $0xc0] sm:$0xff]
      %v314 = vld [vmem:[%s217 + $0xc8] sm:$0xff]
      %v315 = vld [vmem:[%s217 + $0xd0] sm:$0xff]
      %v316 = vld [vmem:[%s217 + $0xd8] sm:$0xff]
      %v317 = vld [vmem:[%s217 + $0xe0] sm:$0xff]
      %v318 = vld [vmem:[%s217 + $0xe8] sm:$0xff]
      %v319 = vld [vmem:[%s217 + $0xf0] sm:$0xff]
      %v320 = vld [vmem:[%s217 + $0xf8] sm:$0xff]
      %s321 = scalar_lea.vmem [#allocation2], 24
      %322 = vst.msk [vmem:[%s321 + $0x1] sm:$0xff] %vm233, %v289
      %323 = vst.msk [vmem:[%s321 + $0x9] sm:$0xff] %vm233, %v290
      %324 = vst.msk [vmem:[%s321 + $0x19] sm:$0xff] %vm233, %v291
      %325 = vst.msk [vmem:[%s321 + $0x21] sm:$0xff] %vm233, %v292
      %326 = vst.msk [vmem:[%s321 + $0x31] sm:$0xff] %vm233, %v293
      %327 = vst.msk [vmem:[%s321 + $0x39] sm:$0xff] %vm233, %v294
      %328 = vst.msk [vmem:[%s321 + $0x49] sm:$0xff] %vm233, %v295
      %329 = vst.msk [vmem:[%s321 + $0x51] sm:$0xff] %vm233, %v296
      %330 = vst.msk [vmem:[%s321 + $0x61] sm:$0xff] %vm233, %v297
      %331 = vst.msk [vmem:[%s321 + $0x69] sm:$0xff] %vm233, %v298
      %332 = vst.msk [vmem:[%s321 + $0x79] sm:$0xff] %vm233, %v299
      %333 = vst.msk [vmem:[%s321 + $0x81] sm:$0xff] %vm233, %v300
      %334 = vst.msk [vmem:[%s321 + $0x91] sm:$0xff] %vm233, %v301
      %335 = vst.msk [vmem:[%s321 + $0x99] sm:$0xff] %vm233, %v302
      %336 = vst.msk [vmem:[%s321 + $0xa9] sm:$0xff] %vm233, %v303
      %337 = vst.msk [vmem:[%s321 + $0xb1] sm:$0xff] %vm233, %v304
      %338 = vst.msk [vmem:[%s321 + $0xc1] sm:$0xff] %vm233, %v305
      %339 = vst.msk [vmem:[%s321 + $0xc9] sm:$0xff] %vm233, %v306
      %340 = vst.msk [vmem:[%s321 + $0xd9] sm:$0xff] %vm233, %v307
      %341 = vst.msk [vmem:[%s321 + $0xe1] sm:$0xff] %vm233, %v308
      %342 = vst.msk [vmem:[%s321 + $0xf1] sm:$0xff] %vm233, %v309
      %343 = vst.msk [vmem:[%s321 + $0xf9] sm:$0xff] %vm233, %v310
      %344 = vst.msk [vmem:[%s321 + $0x109] sm:$0xff] %vm233, %v311
      %345 = vst.msk [vmem:[%s321 + $0x111] sm:$0xff] %vm233, %v312
      %346 = vst.msk [vmem:[%s321 + $0x121] sm:$0xff] %vm233, %v313
      %347 = vst.msk [vmem:[%s321 + $0x129] sm:$0xff] %vm233, %v314
      %348 = vst.msk [vmem:[%s321 + $0x139] sm:$0xff] %vm233, %v315
      %349 = vst.msk [vmem:[%s321 + $0x141] sm:$0xff] %vm233, %v316
      %350 = vst.msk [vmem:[%s321 + $0x151] sm:$0xff] %vm233, %v317
      %351 = vst.msk [vmem:[%s321 + $0x159] sm:$0xff] %vm233, %v318
      %352 = vst.msk [vmem:[%s321 + $0x169] sm:$0xff] %vm233, %v319
      %353 = vst.msk [vmem:[%s321 + $0x171] sm:$0xff] %vm233, %v320
      %v354 = vld [vmem:[#allocation2] sm:$0xff]
      %v355 = vld [vmem:[#allocation2 + $0x8] sm:$0xff]
      %v356 = vld [vmem:[#allocation2 + $0x10] sm:$0x3]
      %v357 = vld [vmem:[#allocation2 + $0x18] sm:$0xff]
      %v358 = vld [vmem:[#allocation2 + $0x20] sm:$0xff]
      %v359 = vld [vmem:[#allocation2 + $0x28] sm:$0x3]
      %v360 = vld [vmem:[#allocation2 + $0x30] sm:$0xff]
      %v361 = vld [vmem:[#allocation2 + $0x38] sm:$0xff]
      %v362 = vld [vmem:[#allocation2 + $0x40] sm:$0x3]
      %v363 = vld [vmem:[#allocation2 + $0x48] sm:$0xff]
      %v364 = vld [vmem:[#allocation2 + $0x50] sm:$0xff]
      %v365 = vld [vmem:[#allocation2 + $0x58] sm:$0x3]
      %v366 = vld [vmem:[#allocation2 + $0x60] sm:$0xff]
      %v367 = vld [vmem:[#allocation2 + $0x68] sm:$0xff]
      %v368 = vld [vmem:[#allocation2 + $0x70] sm:$0x3]
      %v369 = vld [vmem:[#allocation2 + $0x78] sm:$0xff]
      %v370 = vld [vmem:[#allocation2 + $0x80] sm:$0xff]
      %v371 = vld [vmem:[#allocation2 + $0x88] sm:$0x3]
      %v372 = vld [vmem:[#allocation2 + $0x90] sm:$0xff]
      %v373 = vld [vmem:[#allocation2 + $0x98] sm:$0xff]
      %v374 = vld [vmem:[#allocation2 + $0xa0] sm:$0x3]
      %v375 = vld [vmem:[#allocation2 + $0xa8] sm:$0xff]
      %v376 = vld [vmem:[#allocation2 + $0xb0] sm:$0xff]
      %v377 = vld [vmem:[#allocation2 + $0xb8] sm:$0x3]
      %v378 = vld [vmem:[#allocation2 + $0xc0] sm:$0xff]
      %v379 = vld [vmem:[#allocation2 + $0xc8] sm:$0xff]
      %v380 = vld [vmem:[#allocation2 + $0xd0] sm:$0x3]
      %v381 = vld [vmem:[#allocation2 + $0xd8] sm:$0xff]
      %v382 = vld [vmem:[#allocation2 + $0xe0] sm:$0xff]
      %v383 = vld [vmem:[#allocation2 + $0xe8] sm:$0x3]
      %v384 = vld [vmem:[#allocation2 + $0xf0] sm:$0xff]
      %v385 = vld [vmem:[#allocation2 + $0xf8] sm:$0xff]
      %v386 = vld [vmem:[#allocation2 + $0x100] sm:$0x3]
      %v387 = vld [vmem:[#allocation2 + $0x108] sm:$0xff]
      %v388 = vld [vmem:[#allocation2 + $0x110] sm:$0xff]
      %v389 = vld [vmem:[#allocation2 + $0x118] sm:$0x3]
      %v390 = vld [vmem:[#allocation2 + $0x120] sm:$0xff]
      %v391 = vld [vmem:[#allocation2 + $0x128] sm:$0xff]
      %v392 = vld [vmem:[#allocation2 + $0x130] sm:$0x3]
      %v393 = vld [vmem:[#allocation2 + $0x138] sm:$0xff]
      %v394 = vld [vmem:[#allocation2 + $0x140] sm:$0xff]
      %v395 = vld [vmem:[#allocation2 + $0x148] sm:$0x3]
      %v396 = vld [vmem:[#allocation2 + $0x150] sm:$0xff]
      %v397 = vld [vmem:[#allocation2 + $0x158] sm:$0xff]
      %v398 = vld [vmem:[#allocation2 + $0x160] sm:$0x3]
      %v399 = vld [vmem:[#allocation2 + $0x168] sm:$0xff]
      %v400 = vld [vmem:[#allocation2 + $0x170] sm:$0xff]
      %v401 = vld [vmem:[#allocation2 + $0x178] sm:$0x3]
      %v402 = vld [vmem:[#allocation2 + $0x180] sm:$0xff]
      %v403 = vld [vmem:[#allocation2 + $0x188] sm:$0xff]
      %v404 = vld [vmem:[#allocation2 + $0x190] sm:$0x3]
      %v405 = vld [vmem:[#allocation2 + $0x198] sm:$0xff]
      %v406 = vld [vmem:[#allocation2 + $0x1a0] sm:$0xff]
      %v407 = vld [vmem:[#allocation2 + $0x1a8] sm:$0x3]
      %v408 = vld [vmem:[%s221] sm:$0x1]
      %v409 = vperm.slane %v408, 0
      %v410 = vmul.f32 %v409, %v354
      %v411 = vmul.f32 %v409, %v355
      %v412 = vmul.f32 %v409, %v357
      %v413 = vmul.f32 %v409, %v358
      %v414 = vmul.f32 %v409, %v360
      %v415 = vmul.f32 %v409, %v361
      %v416 = vmul.f32 %v409, %v363
      %v417 = vmul.f32 %v409, %v364
      %v418 = vmul.f32 %v409, %v366
      %v419 = vmul.f32 %v409, %v367
      %v420 = vmul.f32 %v409, %v369
      %v421 = vmul.f32 %v409, %v370
      %v422 = vmul.f32 %v409, %v372
      %v423 = vmul.f32 %v409, %v373
      %v424 = vmul.f32 %v409, %v375
      %v425 = vmul.f32 %v409, %v376
      %v426 = vmul.f32 %v409, %v378
      %v427 = vmul.f32 %v409, %v379
      %v428 = vmul.f32 %v409, %v381
      %v429 = vmul.f32 %v409, %v382
      %v430 = vmul.f32 %v409, %v384
      %v431 = vmul.f32 %v409, %v385
      %v432 = vmul.f32 %v409, %v387
      %v433 = vmul.f32 %v409, %v388
      %v434 = vmul.f32 %v409, %v390
      %v435 = vmul.f32 %v409, %v391
      %v436 = vmul.f32 %v409, %v393
      %v437 = vmul.f32 %v409, %v394
      %v438 = vmul.f32 %v409, %v396
      %v439 = vmul.f32 %v409, %v397
      %v440 = vmul.f32 %v409, %v399
      %v441 = vmul.f32 %v409, %v400
      %v442 = vadd.f32 %v410, 0.0
      %v443 = vadd.f32 %v411, 0.0
      %v444 = vadd.f32 %v412, 0.0
      %v445 = vadd.f32 %v413, 0.0
      %v446 = vadd.f32 %v414, 0.0
      %v447 = vadd.f32 %v415, 0.0
      %v448 = vadd.f32 %v416, 0.0
      %v449 = vadd.f32 %v417, 0.0
      %v450 = vadd.f32 %v418, 0.0
      %v451 = vadd.f32 %v419, 0.0
      %v452 = vadd.f32 %v420, 0.0
      %v453 = vadd.f32 %v421, 0.0
      %v454 = vadd.f32 %v422, 0.0
      %v455 = vadd.f32 %v423, 0.0
      %v456 = vadd.f32 %v424, 0.0
      %v457 = vadd.f32 %v425, 0.0
      %v458 = vadd.f32 %v426, 0.0
      %v459 = vadd.f32 %v427, 0.0
      %v460 = vadd.f32 %v428, 0.0
      %v461 = vadd.f32 %v429, 0.0
      %v462 = vadd.f32 %v430, 0.0
      %v463 = vadd.f32 %v431, 0.0
      %v464 = vadd.f32 %v432, 0.0
      %v465 = vadd.f32 %v433, 0.0
      %v466 = vadd.f32 %v434, 0.0
      %v467 = vadd.f32 %v435, 0.0
      %v468 = vadd.f32 %v436, 0.0
      %v469 = vadd.f32 %v437, 0.0
      %v470 = vadd.f32 %v438, 0.0
      %v471 = vadd.f32 %v439, 0.0
      %v472 = vadd.f32 %v440, 0.0
      %v473 = vadd.f32 %v441, 0.0
      %v474 = vld [vmem:[%s221 + $0x1] sm:$0x1]
      %v475 = vperm.slane %v474, 0
      %v476 = vmul.f32 %v475, %v354
      %v477 = vmul.f32 %v475, %v355
      %v478 = vmul.f32 %v475, %v356
      %v479 = vmul.f32 %v475, %v357
      %v480 = vmul.f32 %v475, %v358
      %v481 = vmul.f32 %v475, %v359
      %v482 = vmul.f32 %v475, %v360
      %v483 = vmul.f32 %v475, %v361
      %v484 = vmul.f32 %v475, %v362
      %v485 = vmul.f32 %v475, %v363
      %v486 = vmul.f32 %v475, %v364
      %v487 = vmul.f32 %v475, %v365
      %v488 = vmul.f32 %v475, %v366
      %v489 = vmul.f32 %v475, %v367
      %v490 = vmul.f32 %v475, %v368
      %v491 = vmul.f32 %v475, %v369
      %v492 = vmul.f32 %v475, %v370
      %v493 = vmul.f32 %v475, %v371
      %v494 = vmul.f32 %v475, %v372
      %v495 = vmul.f32 %v475, %v373
      %v496 = vmul.f32 %v475, %v374
      %v497 = vmul.f32 %v475, %v375
      %v498 = vmul.f32 %v475, %v376
      %v499 = vmul.f32 %v475, %v377
      %v500 = vmul.f32 %v475, %v378
      %v501 = vmul.f32 %v475, %v379
      %v502 = vmul.f32 %v475, %v380
      %v503 = vmul.f32 %v475, %v381
      %v504 = vmul.f32 %v475, %v382
      %v505 = vmul.f32 %v475, %v383
      %v506 = vmul.f32 %v475, %v384
      %v507 = vmul.f32 %v475, %v385
      %v508 = vmul.f32 %v475, %v386
      %v509 = vmul.f32 %v475, %v387
      %v510 = vmul.f32 %v475, %v388
      %v511 = vmul.f32 %v475, %v389
      %v512 = vmul.f32 %v475, %v390
      %v513 = vmul.f32 %v475, %v391
      %v514 = vmul.f32 %v475, %v392
      %v515 = vmul.f32 %v475, %v393
      %v516 = vmul.f32 %v475, %v394
      %v517 = vmul.f32 %v475, %v395
      %v518 = vmul.f32 %v475, %v396
      %v519 = vmul.f32 %v475, %v397
      %v520 = vmul.f32 %v475, %v398
      %v521 = vmul.f32 %v475, %v399
      %v522 = vmul.f32 %v475, %v400
      %v523 = vmul.f32 %v475, %v401
      %vm572 = vcmask 1046528
      %v573 = vrot.slane %v476, 1
      %v574 = vrot.slane %v477, 1
      %v575 = vsel %vm572, %v573, %v574
      %v576 = vrot.slane %v478, 1
      %v577 = vsel %vm572, %v574, %v576
      %v578 = vrot.slane %v479, 1
      %v579 = vrot.slane %v480, 1
      %v580 = vsel %vm572, %v578, %v579
      %v581 = vrot.slane %v481, 1
      %v582 = vsel %vm572, %v579, %v581
      %v583 = vrot.slane %v482, 1
      %v584 = vrot.slane %v483, 1
      %v585 = vsel %vm572, %v583, %v584
      %v586 = vrot.slane %v484, 1
      %v587 = vsel %vm572, %v584, %v586
      %v588 = vrot.slane %v485, 1
      %v589 = vrot.slane %v486, 1
      %v590 = vsel %vm572, %v588, %v589
      %v591 = vrot.slane %v487, 1
      %v592 = vsel %vm572, %v589, %v591
      %v593 = vrot.slane %v488, 1
      %v594 = vrot.slane %v489, 1
      %v595 = vsel %vm572, %v593, %v594
      %v596 = vrot.slane %v490, 1
      %v597 = vsel %vm572, %v594, %v596
      %v598 = vrot.slane %v491, 1
      %v599 = vrot.slane %v492, 1
      %v600 = vsel %vm572, %v598, %v599
      %v601 = vrot.slane %v493, 1
      %v602 = vsel %vm572, %v599, %v601
      %v603 = vrot.slane %v494, 1
      %v604 = vrot.slane %v495, 1
      %v605 = vsel %vm572, %v603, %v604
      %v606 = vrot.slane %v496, 1
      %v607 = vsel %vm572, %v604, %v606
      %v608 = vrot.slane %v497, 1
      %v609 = vrot.slane %v498, 1
      %v610 = vsel %vm572, %v608, %v609
      %v611 = vrot.slane %v499, 1
      %v612 = vsel %vm572, %v609, %v611
      %v613 = vrot.slane %v500, 1
      %v614 = vrot.slane %v501, 1
      %v615 = vsel %vm572, %v613, %v614
      %v616 = vrot.slane %v502, 1
      %v617 = vsel %vm572, %v614, %v616
      %v618 = vrot.slane %v503, 1
      %v619 = vrot.slane %v504, 1
      %v620 = vsel %vm572, %v618, %v619
      %v621 = vrot.slane %v505, 1
      %v622 = vsel %vm572, %v619, %v621
      %v623 = vrot.slane %v506, 1
      %v624 = vrot.slane %v507, 1
      %v625 = vsel %vm572, %v623, %v624
      %v626 = vrot.slane %v508, 1
      %v627 = vsel %vm572, %v624, %v626
      %v628 = vrot.slane %v509, 1
      %v629 = vrot.slane %v510, 1
      %v630 = vsel %vm572, %v628, %v629
      %v631 = vrot.slane %v511, 1
      %v632 = vsel %vm572, %v629, %v631
      %v633 = vrot.slane %v512, 1
      %v634 = vrot.slane %v513, 1
      %v635 = vsel %vm572, %v633, %v634
      %v636 = vrot.slane %v514, 1
      %v637 = vsel %vm572, %v634, %v636
      %v638 = vrot.slane %v515, 1
      %v639 = vrot.slane %v516, 1
      %v640 = vsel %vm572, %v638, %v639
      %v641 = vrot.slane %v517, 1
      %v642 = vsel %vm572, %v639, %v641
      %v643 = vrot.slane %v518, 1
      %v644 = vrot.slane %v519, 1
      %v645 = vsel %vm572, %v643, %v644
      %v646 = vrot.slane %v520, 1
      %v647 = vsel %vm572, %v644, %v646
      %v648 = vrot.slane %v521, 1
      %v649 = vrot.slane %v522, 1
      %v650 = vsel %vm572, %v648, %v649
      %v651 = vrot.slane %v523, 1
      %v652 = vsel %vm572, %v649, %v651
      %v685 = vadd.f32 %v442, %v575
      %v686 = vadd.f32 %v443, %v577
      %v687 = vadd.f32 %v444, %v580
      %v688 = vadd.f32 %v445, %v582
      %v689 = vadd.f32 %v446, %v585
      %v690 = vadd.f32 %v447, %v587
      %v691 = vadd.f32 %v448, %v590
      %v692 = vadd.f32 %v449, %v592
      %v693 = vadd.f32 %v450, %v595
      %v694 = vadd.f32 %v451, %v597
      %v695 = vadd.f32 %v452, %v600
      %v696 = vadd.f32 %v453, %v602
      %v697 = vadd.f32 %v454, %v605
      %v698 = vadd.f32 %v455, %v607
      %v699 = vadd.f32 %v456, %v610
      %v700 = vadd.f32 %v457, %v612
      %v701 = vadd.f32 %v458, %v615
      %v702 = vadd.f32 %v459, %v617
      %v703 = vadd.f32 %v460, %v620
      %v704 = vadd.f32 %v461, %v622
      %v705 = vadd.f32 %v462, %v625
      %v706 = vadd.f32 %v463, %v627
      %v707 = vadd.f32 %v464, %v630
      %v708 = vadd.f32 %v465, %v632
      %v709 = vadd.f32 %v466, %v635
      %v710 = vadd.f32 %v467, %v637
      %v711 = vadd.f32 %v468, %v640
      %v712 = vadd.f32 %v469, %v642
      %v713 = vadd.f32 %v470, %v645
      %v714 = vadd.f32 %v471, %v647
      %v715 = vadd.f32 %v472, %v650
      %v716 = vadd.f32 %v473, %v652
      %v717 = vld [vmem:[%s221 + $0x2] sm:$0x1]
      %v718 = vperm.slane %v717, 0
      %v719 = vmul.f32 %v718, %v354
      %v720 = vmul.f32 %v718, %v355
      %v721 = vmul.f32 %v718, %v356
      %v722 = vmul.f32 %v718, %v357
      %v723 = vmul.f32 %v718, %v358
      %v724 = vmul.f32 %v718, %v359
      %v725 = vmul.f32 %v718, %v360
      %v726 = vmul.f32 %v718, %v361
      %v727 = vmul.f32 %v718, %v362
      %v728 = vmul.f32 %v718, %v363
      %v729 = vmul.f32 %v718, %v364
      %v730 = vmul.f32 %v718, %v365
      %v731 = vmul.f32 %v718, %v366
      %v732 = vmul.f32 %v718, %v367
      %v733 = vmul.f32 %v718, %v368
      %v734 = vmul.f32 %v718, %v369
      %v735 = vmul.f32 %v718, %v370
      %v736 = vmul.f32 %v718, %v371
      %v737 = vmul.f32 %v718, %v372
      %v738 = vmul.f32 %v718, %v373
      %v739 = vmul.f32 %v718, %v374
      %v740 = vmul.f32 %v718, %v375
      %v741 = vmul.f32 %v718, %v376
      %v742 = vmul.f32 %v718, %v377
      %v743 = vmul.f32 %v718, %v378
      %v744 = vmul.f32 %v718, %v379
      %v745 = vmul.f32 %v718, %v380
      %v746 = vmul.f32 %v718, %v381
      %v747 = vmul.f32 %v718, %v382
      %v748 = vmul.f32 %v718, %v383
      %v749 = vmul.f32 %v718, %v384
      %v750 = vmul.f32 %v718, %v385
      %v751 = vmul.f32 %v718, %v386
      %v752 = vmul.f32 %v718, %v387
      %v753 = vmul.f32 %v718, %v388
      %v754 = vmul.f32 %v718, %v389
      %v755 = vmul.f32 %v718, %v390
      %v756 = vmul.f32 %v718, %v391
      %v757 = vmul.f32 %v718, %v392
      %v758 = vmul.f32 %v718, %v393
      %v759 = vmul.f32 %v718, %v394
      %v760 = vmul.f32 %v718, %v395
      %v761 = vmul.f32 %v718, %v396
      %v762 = vmul.f32 %v718, %v397
      %v763 = vmul.f32 %v718, %v398
      %v764 = vmul.f32 %v718, %v399
      %v765 = vmul.f32 %v718, %v400
      %v766 = vmul.f32 %v718, %v401
      %vm815 = vcmask 1045504
      %v816 = vrot.slane %v719, 2
      %v817 = vrot.slane %v720, 2
      %v818 = vsel %vm815, %v816, %v817
      %v819 = vrot.slane %v721, 2
      %v820 = vsel %vm815, %v817, %v819
      %v821 = vrot.slane %v722, 2
      %v822 = vrot.slane %v723, 2
      %v823 = vsel %vm815, %v821, %v822
      %v824 = vrot.slane %v724, 2
      %v825 = vsel %vm815, %v822, %v824
      %v826 = vrot.slane %v725, 2
      %v827 = vrot.slane %v726, 2
      %v828 = vsel %vm815, %v826, %v827
      %v829 = vrot.slane %v727, 2
      %v830 = vsel %vm815, %v827, %v829
      %v831 = vrot.slane %v728, 2
      %v832 = vrot.slane %v729, 2
      %v833 = vsel %vm815, %v831, %v832
      %v834 = vrot.slane %v730, 2
      %v835 = vsel %vm815, %v832, %v834
      %v836 = vrot.slane %v731, 2
      %v837 = vrot.slane %v732, 2
      %v838 = vsel %vm815, %v836, %v837
      %v839 = vrot.slane %v733, 2
      %v840 = vsel %vm815, %v837, %v839
      %v841 = vrot.slane %v734, 2
      %v842 = vrot.slane %v735, 2
      %v843 = vsel %vm815, %v841, %v842
      %v844 = vrot.slane %v736, 2
      %v845 = vsel %vm815, %v842, %v844
      %v846 = vrot.slane %v737, 2
      %v847 = vrot.slane %v738, 2
      %v848 = vsel %vm815, %v846, %v847
      %v849 = vrot.slane %v739, 2
      %v850 = vsel %vm815, %v847, %v849
      %v851 = vrot.slane %v740, 2
      %v852 = vrot.slane %v741, 2
      %v853 = vsel %vm815, %v851, %v852
      %v854 = vrot.slane %v742, 2
      %v855 = vsel %vm815, %v852, %v854
      %v856 = vrot.slane %v743, 2
      %v857 = vrot.slane %v744, 2
      %v858 = vsel %vm815, %v856, %v857
      %v859 = vrot.slane %v745, 2
      %v860 = vsel %vm815, %v857, %v859
      %v861 = vrot.slane %v746, 2
      %v862 = vrot.slane %v747, 2
      %v863 = vsel %vm815, %v861, %v862
      %v864 = vrot.slane %v748, 2
      %v865 = vsel %vm815, %v862, %v864
      %v866 = vrot.slane %v749, 2
      %v867 = vrot.slane %v750, 2
      %v868 = vsel %vm815, %v866, %v867
      %v869 = vrot.slane %v751, 2
      %v870 = vsel %vm815, %v867, %v869
      %v871 = vrot.slane %v752, 2
      %v872 = vrot.slane %v753, 2
      %v873 = vsel %vm815, %v871, %v872
      %v874 = vrot.slane %v754, 2
      %v875 = vsel %vm815, %v872, %v874
      %v876 = vrot.slane %v755, 2
      %v877 = vrot.slane %v756, 2
      %v878 = vsel %vm815, %v876, %v877
      %v879 = vrot.slane %v757, 2
      %v880 = vsel %vm815, %v877, %v879
      %v881 = vrot.slane %v758, 2
      %v882 = vrot.slane %v759, 2
      %v883 = vsel %vm815, %v881, %v882
      %v884 = vrot.slane %v760, 2
      %v885 = vsel %vm815, %v882, %v884
      %v886 = vrot.slane %v761, 2
      %v887 = vrot.slane %v762, 2
      %v888 = vsel %vm815, %v886, %v887
      %v889 = vrot.slane %v763, 2
      %v890 = vsel %vm815, %v887, %v889
      %v891 = vrot.slane %v764, 2
      %v892 = vrot.slane %v765, 2
      %v893 = vsel %vm815, %v891, %v892
      %v894 = vrot.slane %v766, 2
      %v895 = vsel %vm815, %v892, %v894
      %v928 = vadd.f32 %v685, %v818
      %v929 = vadd.f32 %v686, %v820
      %v930 = vadd.f32 %v687, %v823
      %v931 = vadd.f32 %v688, %v825
      %v932 = vadd.f32 %v689, %v828
      %v933 = vadd.f32 %v690, %v830
      %v934 = vadd.f32 %v691, %v833
      %v935 = vadd.f32 %v692, %v835
      %v936 = vadd.f32 %v693, %v838
      %v937 = vadd.f32 %v694, %v840
      %v938 = vadd.f32 %v695, %v843
      %v939 = vadd.f32 %v696, %v845
      %v940 = vadd.f32 %v697, %v848
      %v941 = vadd.f32 %v698, %v850
      %v942 = vadd.f32 %v699, %v853
      %v943 = vadd.f32 %v700, %v855
      %v944 = vadd.f32 %v701, %v858
      %v945 = vadd.f32 %v702, %v860
      %v946 = vadd.f32 %v703, %v863
      %v947 = vadd.f32 %v704, %v865
      %v948 = vadd.f32 %v705, %v868
      %v949 = vadd.f32 %v706, %v870
      %v950 = vadd.f32 %v707, %v873
      %v951 = vadd.f32 %v708, %v875
      %v952 = vadd.f32 %v709, %v878
      %v953 = vadd.f32 %v710, %v880
      %v954 = vadd.f32 %v711, %v883
      %v955 = vadd.f32 %v712, %v885
      %v956 = vadd.f32 %v713, %v888
      %v957 = vadd.f32 %v714, %v890
      %v958 = vadd.f32 %v715, %v893
      %v959 = vadd.f32 %v716, %v895
      %v960 = vld [vmem:[%s221 + $0x3] sm:$0x1]
      %v961 = vperm.slane %v960, 0
      %v962 = vmul.f32 %v961, %v357
      %v963 = vmul.f32 %v961, %v358
      %v964 = vmul.f32 %v961, %v360
      %v965 = vmul.f32 %v961, %v361
      %v966 = vmul.f32 %v961, %v363
      %v967 = vmul.f32 %v961, %v364
      %v968 = vmul.f32 %v961, %v366
      %v969 = vmul.f32 %v961, %v367
      %v970 = vmul.f32 %v961, %v369
      %v971 = vmul.f32 %v961, %v370
      %v972 = vmul.f32 %v961, %v372
      %v973 = vmul.f32 %v961, %v373
      %v974 = vmul.f32 %v961, %v375
      %v975 = vmul.f32 %v961, %v376
      %v976 = vmul.f32 %v961, %v378
      %v977 = vmul.f32 %v961, %v379
      %v978 = vmul.f32 %v961, %v381
      %v979 = vmul.f32 %v961, %v382
      %v980 = vmul.f32 %v961, %v384
      %v981 = vmul.f32 %v961, %v385
      %v982 = vmul.f32 %v961, %v387
      %v983 = vmul.f32 %v961, %v388
      %v984 = vmul.f32 %v961, %v390
      %v985 = vmul.f32 %v961, %v391
      %v986 = vmul.f32 %v961, %v393
      %v987 = vmul.f32 %v961, %v394
      %v988 = vmul.f32 %v961, %v396
      %v989 = vmul.f32 %v961, %v397
      %v990 = vmul.f32 %v961, %v399
      %v991 = vmul.f32 %v961, %v400
      %v992 = vmul.f32 %v961, %v402
      %v993 = vmul.f32 %v961, %v403
      %v994 = vadd.f32 %v928, %v962
      %v995 = vadd.f32 %v929, %v963
      %v996 = vadd.f32 %v930, %v964
      %v997 = vadd.f32 %v931, %v965
      %v998 = vadd.f32 %v932, %v966
      %v999 = vadd.f32 %v933, %v967
      %v1000 = vadd.f32 %v934, %v968
      %v1001 = vadd.f32 %v935, %v969
      %v1002 = vadd.f32 %v936, %v970
      %v1003 = vadd.f32 %v937, %v971
      %v1004 = vadd.f32 %v938, %v972
      %v1005 = vadd.f32 %v939, %v973
      %v1006 = vadd.f32 %v940, %v974
      %v1007 = vadd.f32 %v941, %v975
      %v1008 = vadd.f32 %v942, %v976
      %v1009 = vadd.f32 %v943, %v977
      %v1010 = vadd.f32 %v944, %v978
      %v1011 = vadd.f32 %v945, %v979
      %v1012 = vadd.f32 %v946, %v980
      %v1013 = vadd.f32 %v947, %v981
      %v1014 = vadd.f32 %v948, %v982
      %v1015 = vadd.f32 %v949, %v983
      %v1016 = vadd.f32 %v950, %v984
      %v1017 = vadd.f32 %v951, %v985
      %v1018 = vadd.f32 %v952, %v986
      %v1019 = vadd.f32 %v953, %v987
      %v1020 = vadd.f32 %v954, %v988
      %v1021 = vadd.f32 %v955, %v989
      %v1022 = vadd.f32 %v956, %v990
      %v1023 = vadd.f32 %v957, %v991
      %v1024 = vadd.f32 %v958, %v992
      %v1025 = vadd.f32 %v959, %v993
      %v1026 = vld [vmem:[%s221 + $0x4] sm:$0x1]
      %v1027 = vperm.slane %v1026, 0
      %v1028 = vmul.f32 %v1027, %v357
      %v1029 = vmul.f32 %v1027, %v358
      %v1030 = vmul.f32 %v1027, %v359
      %v1031 = vmul.f32 %v1027, %v360
      %v1032 = vmul.f32 %v1027, %v361
      %v1033 = vmul.f32 %v1027, %v362
      %v1034 = vmul.f32 %v1027, %v363
      %v1035 = vmul.f32 %v1027, %v364
      %v1036 = vmul.f32 %v1027, %v365
      %v1037 = vmul.f32 %v1027, %v366
      %v1038 = vmul.f32 %v1027, %v367
      %v1039 = vmul.f32 %v1027, %v368
      %v1040 = vmul.f32 %v1027, %v369
      %v1041 = vmul.f32 %v1027, %v370
      %v1042 = vmul.f32 %v1027, %v371
      %v1043 = vmul.f32 %v1027, %v372
      %v1044 = vmul.f32 %v1027, %v373
      %v1045 = vmul.f32 %v1027, %v374
      %v1046 = vmul.f32 %v1027, %v375
      %v1047 = vmul.f32 %v1027, %v376
      %v1048 = vmul.f32 %v1027, %v377
      %v1049 = vmul.f32 %v1027, %v378
      %v1050 = vmul.f32 %v1027, %v379
      %v1051 = vmul.f32 %v1027, %v380
      %v1052 = vmul.f32 %v1027, %v381
      %v1053 = vmul.f32 %v1027, %v382
      %v1054 = vmul.f32 %v1027, %v383
      %v1055 = vmul.f32 %v1027, %v384
      %v1056 = vmul.f32 %v1027, %v385
      %v1057 = vmul.f32 %v1027, %v386
      %v1058 = vmul.f32 %v1027, %v387
      %v1059 = vmul.f32 %v1027, %v388
      %v1060 = vmul.f32 %v1027, %v389
      %v1061 = vmul.f32 %v1027, %v390
      %v1062 = vmul.f32 %v1027, %v391
      %v1063 = vmul.f32 %v1027, %v392
      %v1064 = vmul.f32 %v1027, %v393
      %v1065 = vmul.f32 %v1027, %v394
      %v1066 = vmul.f32 %v1027, %v395
      %v1067 = vmul.f32 %v1027, %v396
      %v1068 = vmul.f32 %v1027, %v397
      %v1069 = vmul.f32 %v1027, %v398
      %v1070 = vmul.f32 %v1027, %v399
      %v1071 = vmul.f32 %v1027, %v400
      %v1072 = vmul.f32 %v1027, %v401
      %v1073 = vmul.f32 %v1027, %v402
      %v1074 = vmul.f32 %v1027, %v403
      %v1075 = vmul.f32 %v1027, %v404
      %v1124 = vrot.slane %v1028, 1
      %v1125 = vrot.slane %v1029, 1
      %v1126 = vsel %vm572, %v1124, %v1125
      %v1127 = vrot.slane %v1030, 1
      %v1128 = vsel %vm572, %v1125, %v1127
      %v1129 = vrot.slane %v1031, 1
      %v1130 = vrot.slane %v1032, 1
      %v1131 = vsel %vm572, %v1129, %v1130
      %v1132 = vrot.slane %v1033, 1
      %v1133 = vsel %vm572, %v1130, %v1132
      %v1134 = vrot.slane %v1034, 1
      %v1135 = vrot.slane %v1035, 1
      %v1136 = vsel %vm572, %v1134, %v1135
      %v1137 = vrot.slane %v1036, 1
      %v1138 = vsel %vm572, %v1135, %v1137
      %v1139 = vrot.slane %v1037, 1
      %v1140 = vrot.slane %v1038, 1
      %v1141 = vsel %vm572, %v1139, %v1140
      %v1142 = vrot.slane %v1039, 1
      %v1143 = vsel %vm572, %v1140, %v1142
      %v1144 = vrot.slane %v1040, 1
      %v1145 = vrot.slane %v1041, 1
      %v1146 = vsel %vm572, %v1144, %v1145
      %v1147 = vrot.slane %v1042, 1
      %v1148 = vsel %vm572, %v1145, %v1147
      %v1149 = vrot.slane %v1043, 1
      %v1150 = vrot.slane %v1044, 1
      %v1151 = vsel %vm572, %v1149, %v1150
      %v1152 = vrot.slane %v1045, 1
      %v1153 = vsel %vm572, %v1150, %v1152
      %v1154 = vrot.slane %v1046, 1
      %v1155 = vrot.slane %v1047, 1
      %v1156 = vsel %vm572, %v1154, %v1155
      %v1157 = vrot.slane %v1048, 1
      %v1158 = vsel %vm572, %v1155, %v1157
      %v1159 = vrot.slane %v1049, 1
      %v1160 = vrot.slane %v1050, 1
      %v1161 = vsel %vm572, %v1159, %v1160
      %v1162 = vrot.slane %v1051, 1
      %v1163 = vsel %vm572, %v1160, %v1162
      %v1164 = vrot.slane %v1052, 1
      %v1165 = vrot.slane %v1053, 1
      %v1166 = vsel %vm572, %v1164, %v1165
      %v1167 = vrot.slane %v1054, 1
      %v1168 = vsel %vm572, %v1165, %v1167
      %v1169 = vrot.slane %v1055, 1
      %v1170 = vrot.slane %v1056, 1
      %v1171 = vsel %vm572, %v1169, %v1170
      %v1172 = vrot.slane %v1057, 1
      %v1173 = vsel %vm572, %v1170, %v1172
      %v1174 = vrot.slane %v1058, 1
      %v1175 = vrot.slane %v1059, 1
      %v1176 = vsel %vm572, %v1174, %v1175
      %v1177 = vrot.slane %v1060, 1
      %v1178 = vsel %vm572, %v1175, %v1177
      %v1179 = vrot.slane %v1061, 1
      %v1180 = vrot.slane %v1062, 1
      %v1181 = vsel %vm572, %v1179, %v1180
      %v1182 = vrot.slane %v1063, 1
      %v1183 = vsel %vm572, %v1180, %v1182
      %v1184 = vrot.slane %v1064, 1
      %v1185 = vrot.slane %v1065, 1
      %v1186 = vsel %vm572, %v1184, %v1185
      %v1187 = vrot.slane %v1066, 1
      %v1188 = vsel %vm572, %v1185, %v1187
      %v1189 = vrot.slane %v1067, 1
      %v1190 = vrot.slane %v1068, 1
      %v1191 = vsel %vm572, %v1189, %v1190
      %v1192 = vrot.slane %v1069, 1
      %v1193 = vsel %vm572, %v1190, %v1192
      %v1194 = vrot.slane %v1070, 1
      %v1195 = vrot.slane %v1071, 1
      %v1196 = vsel %vm572, %v1194, %v1195
      %v1197 = vrot.slane %v1072, 1
      %v1198 = vsel %vm572, %v1195, %v1197
      %v1199 = vrot.slane %v1073, 1
      %v1200 = vrot.slane %v1074, 1
      %v1201 = vsel %vm572, %v1199, %v1200
      %v1202 = vrot.slane %v1075, 1
      %v1203 = vsel %vm572, %v1200, %v1202
      %v1236 = vadd.f32 %v994, %v1126
      %v1237 = vadd.f32 %v995, %v1128
      %v1238 = vadd.f32 %v996, %v1131
      %v1239 = vadd.f32 %v997, %v1133
      %v1240 = vadd.f32 %v998, %v1136
      %v1241 = vadd.f32 %v999, %v1138
      %v1242 = vadd.f32 %v1000, %v1141
      %v1243 = vadd.f32 %v1001, %v1143
      %v1244 = vadd.f32 %v1002, %v1146
      %v1245 = vadd.f32 %v1003, %v1148
      %v1246 = vadd.f32 %v1004, %v1151
      %v1247 = vadd.f32 %v1005, %v1153
      %v1248 = vadd.f32 %v1006, %v1156
      %v1249 = vadd.f32 %v1007, %v1158
      %v1250 = vadd.f32 %v1008, %v1161
      %v1251 = vadd.f32 %v1009, %v1163
      %v1252 = vadd.f32 %v1010, %v1166
      %v1253 = vadd.f32 %v1011, %v1168
      %v1254 = vadd.f32 %v1012, %v1171
      %v1255 = vadd.f32 %v1013, %v1173
      %v1256 = vadd.f32 %v1014, %v1176
      %v1257 = vadd.f32 %v1015, %v1178
      %v1258 = vadd.f32 %v1016, %v1181
      %v1259 = vadd.f32 %v1017, %v1183
      %v1260 = vadd.f32 %v1018, %v1186
      %v1261 = vadd.f32 %v1019, %v1188
      %v1262 = vadd.f32 %v1020, %v1191
      %v1263 = vadd.f32 %v1021, %v1193
      %v1264 = vadd.f32 %v1022, %v1196
      %v1265 = vadd.f32 %v1023, %v1198
      %v1266 = vadd.f32 %v1024, %v1201
      %v1267 = vadd.f32 %v1025, %v1203
      %v1268 = vld [vmem:[%s221 + $0x5] sm:$0x1]
      %v1269 = vperm.slane %v1268, 0
      %v1270 = vmul.f32 %v1269, %v357
      %v1271 = vmul.f32 %v1269, %v358
      %v1272 = vmul.f32 %v1269, %v359
      %v1273 = vmul.f32 %v1269, %v360
      %v1274 = vmul.f32 %v1269, %v361
      %v1275 = vmul.f32 %v1269, %v362
      %v1276 = vmul.f32 %v1269, %v363
      %v1277 = vmul.f32 %v1269, %v364
      %v1278 = vmul.f32 %v1269, %v365
      %v1279 = vmul.f32 %v1269, %v366
      %v1280 = vmul.f32 %v1269, %v367
      %v1281 = vmul.f32 %v1269, %v368
      %v1282 = vmul.f32 %v1269, %v369
      %v1283 = vmul.f32 %v1269, %v370
      %v1284 = vmul.f32 %v1269, %v371
      %v1285 = vmul.f32 %v1269, %v372
      %v1286 = vmul.f32 %v1269, %v373
      %v1287 = vmul.f32 %v1269, %v374
      %v1288 = vmul.f32 %v1269, %v375
      %v1289 = vmul.f32 %v1269, %v376
      %v1290 = vmul.f32 %v1269, %v377
      %v1291 = vmul.f32 %v1269, %v378
      %v1292 = vmul.f32 %v1269, %v379
      %v1293 = vmul.f32 %v1269, %v380
      %v1294 = vmul.f32 %v1269, %v381
      %v1295 = vmul.f32 %v1269, %v382
      %v1296 = vmul.f32 %v1269, %v383
      %v1297 = vmul.f32 %v1269, %v384
      %v1298 = vmul.f32 %v1269, %v385
      %v1299 = vmul.f32 %v1269, %v386
      %v1300 = vmul.f32 %v1269, %v387
      %v1301 = vmul.f32 %v1269, %v388
      %v1302 = vmul.f32 %v1269, %v389
      %v1303 = vmul.f32 %v1269, %v390
      %v1304 = vmul.f32 %v1269, %v391
      %v1305 = vmul.f32 %v1269, %v392
      %v1306 = vmul.f32 %v1269, %v393
      %v1307 = vmul.f32 %v1269, %v394
      %v1308 = vmul.f32 %v1269, %v395
      %v1309 = vmul.f32 %v1269, %v396
      %v1310 = vmul.f32 %v1269, %v397
      %v1311 = vmul.f32 %v1269, %v398
      %v1312 = vmul.f32 %v1269, %v399
      %v1313 = vmul.f32 %v1269, %v400
      %v1314 = vmul.f32 %v1269, %v401
      %v1315 = vmul.f32 %v1269, %v402
      %v1316 = vmul.f32 %v1269, %v403
      %v1317 = vmul.f32 %v1269, %v404
      %v1366 = vrot.slane %v1270, 2
      %v1367 = vrot.slane %v1271, 2
      %v1368 = vsel %vm815, %v1366, %v1367
      %v1369 = vrot.slane %v1272, 2
      %v1370 = vsel %vm815, %v1367, %v1369
      %v1371 = vrot.slane %v1273, 2
      %v1372 = vrot.slane %v1274, 2
      %v1373 = vsel %vm815, %v1371, %v1372
      %v1374 = vrot.slane %v1275, 2
      %v1375 = vsel %vm815, %v1372, %v1374
      %v1376 = vrot.slane %v1276, 2
      %v1377 = vrot.slane %v1277, 2
      %v1378 = vsel %vm815, %v1376, %v1377
      %v1379 = vrot.slane %v1278, 2
      %v1380 = vsel %vm815, %v1377, %v1379
      %v1381 = vrot.slane %v1279, 2
      %v1382 = vrot.slane %v1280, 2
      %v1383 = vsel %vm815, %v1381, %v1382
      %v1384 = vrot.slane %v1281, 2
      %v1385 = vsel %vm815, %v1382, %v1384
      %v1386 = vrot.slane %v1282, 2
      %v1387 = vrot.slane %v1283, 2
      %v1388 = vsel %vm815, %v1386, %v1387
      %v1389 = vrot.slane %v1284, 2
      %v1390 = vsel %vm815, %v1387, %v1389
      %v1391 = vrot.slane %v1285, 2
      %v1392 = vrot.slane %v1286, 2
      %v1393 = vsel %vm815, %v1391, %v1392
      %v1394 = vrot.slane %v1287, 2
      %v1395 = vsel %vm815, %v1392, %v1394
      %v1396 = vrot.slane %v1288, 2
      %v1397 = vrot.slane %v1289, 2
      %v1398 = vsel %vm815, %v1396, %v1397
      %v1399 = vrot.slane %v1290, 2
      %v1400 = vsel %vm815, %v1397, %v1399
      %v1401 = vrot.slane %v1291, 2
      %v1402 = vrot.slane %v1292, 2
      %v1403 = vsel %vm815, %v1401, %v1402
      %v1404 = vrot.slane %v1293, 2
      %v1405 = vsel %vm815, %v1402, %v1404
      %v1406 = vrot.slane %v1294, 2
      %v1407 = vrot.slane %v1295, 2
      %v1408 = vsel %vm815, %v1406, %v1407
      %v1409 = vrot.slane %v1296, 2
      %v1410 = vsel %vm815, %v1407, %v1409
      %v1411 = vrot.slane %v1297, 2
      %v1412 = vrot.slane %v1298, 2
      %v1413 = vsel %vm815, %v1411, %v1412
      %v1414 = vrot.slane %v1299, 2
      %v1415 = vsel %vm815, %v1412, %v1414
      %v1416 = vrot.slane %v1300, 2
      %v1417 = vrot.slane %v1301, 2
      %v1418 = vsel %vm815, %v1416, %v1417
      %v1419 = vrot.slane %v1302, 2
      %v1420 = vsel %vm815, %v1417, %v1419
      %v1421 = vrot.slane %v1303, 2
      %v1422 = vrot.slane %v1304, 2
      %v1423 = vsel %vm815, %v1421, %v1422
      %v1424 = vrot.slane %v1305, 2
      %v1425 = vsel %vm815, %v1422, %v1424
      %v1426 = vrot.slane %v1306, 2
      %v1427 = vrot.slane %v1307, 2
      %v1428 = vsel %vm815, %v1426, %v1427
      %v1429 = vrot.slane %v1308, 2
      %v1430 = vsel %vm815, %v1427, %v1429
      %v1431 = vrot.slane %v1309, 2
      %v1432 = vrot.slane %v1310, 2
      %v1433 = vsel %vm815, %v1431, %v1432
      %v1434 = vrot.slane %v1311, 2
      %v1435 = vsel %vm815, %v1432, %v1434
      %v1436 = vrot.slane %v1312, 2
      %v1437 = vrot.slane %v1313, 2
      %v1438 = vsel %vm815, %v1436, %v1437
      %v1439 = vrot.slane %v1314, 2
      %v1440 = vsel %vm815, %v1437, %v1439
      %v1441 = vrot.slane %v1315, 2
      %v1442 = vrot.slane %v1316, 2
      %v1443 = vsel %vm815, %v1441, %v1442
      %v1444 = vrot.slane %v1317, 2
      %v1445 = vsel %vm815, %v1442, %v1444
      %v1478 = vadd.f32 %v1236, %v1368
      %v1479 = vadd.f32 %v1237, %v1370
      %v1480 = vadd.f32 %v1238, %v1373
      %v1481 = vadd.f32 %v1239, %v1375
      %v1482 = vadd.f32 %v1240, %v1378
      %v1483 = vadd.f32 %v1241, %v1380
      %v1484 = vadd.f32 %v1242, %v1383
      %v1485 = vadd.f32 %v1243, %v1385
      %v1486 = vadd.f32 %v1244, %v1388
      %v1487 = vadd.f32 %v1245, %v1390
      %v1488 = vadd.f32 %v1246, %v1393
      %v1489 = vadd.f32 %v1247, %v1395
      %v1490 = vadd.f32 %v1248, %v1398
      %v1491 = vadd.f32 %v1249, %v1400
      %v1492 = vadd.f32 %v1250, %v1403
      %v1493 = vadd.f32 %v1251, %v1405
      %v1494 = vadd.f32 %v1252, %v1408
      %v1495 = vadd.f32 %v1253, %v1410
      %v1496 = vadd.f32 %v1254, %v1413
      %v1497 = vadd.f32 %v1255, %v1415
      %v1498 = vadd.f32 %v1256, %v1418
      %v1499 = vadd.f32 %v1257, %v1420
      %v1500 = vadd.f32 %v1258, %v1423
      %v1501 = vadd.f32 %v1259, %v1425
      %v1502 = vadd.f32 %v1260, %v1428
      %v1503 = vadd.f32 %v1261, %v1430
      %v1504 = vadd.f32 %v1262, %v1433
      %v1505 = vadd.f32 %v1263, %v1435
      %v1506 = vadd.f32 %v1264, %v1438
      %v1507 = vadd.f32 %v1265, %v1440
      %v1508 = vadd.f32 %v1266, %v1443
      %v1509 = vadd.f32 %v1267, %v1445
      %v1510 = vld [vmem:[%s221 + $0x6] sm:$0x1]
      %v1511 = vperm.slane %v1510, 0
      %v1512 = vmul.f32 %v1511, %v360
      %v1513 = vmul.f32 %v1511, %v361
      %v1514 = vmul.f32 %v1511, %v363
      %v1515 = vmul.f32 %v1511, %v364
      %v1516 = vmul.f32 %v1511, %v366
      %v1517 = vmul.f32 %v1511, %v367
      %v1518 = vmul.f32 %v1511, %v369
      %v1519 = vmul.f32 %v1511, %v370
      %v1520 = vmul.f32 %v1511, %v372
      %v1521 = vmul.f32 %v1511, %v373
      %v1522 = vmul.f32 %v1511, %v375
      %v1523 = vmul.f32 %v1511, %v376
      %v1524 = vmul.f32 %v1511, %v378
      %v1525 = vmul.f32 %v1511, %v379
      %v1526 = vmul.f32 %v1511, %v381
      %v1527 = vmul.f32 %v1511, %v382
      %v1528 = vmul.f32 %v1511, %v384
      %v1529 = vmul.f32 %v1511, %v385
      %v1530 = vmul.f32 %v1511, %v387
      %v1531 = vmul.f32 %v1511, %v388
      %v1532 = vmul.f32 %v1511, %v390
      %v1533 = vmul.f32 %v1511, %v391
      %v1534 = vmul.f32 %v1511, %v393
      %v1535 = vmul.f32 %v1511, %v394
      %v1536 = vmul.f32 %v1511, %v396
      %v1537 = vmul.f32 %v1511, %v397
      %v1538 = vmul.f32 %v1511, %v399
      %v1539 = vmul.f32 %v1511, %v400
      %v1540 = vmul.f32 %v1511, %v402
      %v1541 = vmul.f32 %v1511, %v403
      %v1542 = vmul.f32 %v1511, %v405
      %v1543 = vmul.f32 %v1511, %v406
      %v1544 = vadd.f32 %v1478, %v1512
      %v1545 = vadd.f32 %v1479, %v1513
      %v1546 = vadd.f32 %v1480, %v1514
      %v1547 = vadd.f32 %v1481, %v1515
      %v1548 = vadd.f32 %v1482, %v1516
      %v1549 = vadd.f32 %v1483, %v1517
      %v1550 = vadd.f32 %v1484, %v1518
      %v1551 = vadd.f32 %v1485, %v1519
      %v1552 = vadd.f32 %v1486, %v1520
      %v1553 = vadd.f32 %v1487, %v1521
      %v1554 = vadd.f32 %v1488, %v1522
      %v1555 = vadd.f32 %v1489, %v1523
      %v1556 = vadd.f32 %v1490, %v1524
      %v1557 = vadd.f32 %v1491, %v1525
      %v1558 = vadd.f32 %v1492, %v1526
      %v1559 = vadd.f32 %v1493, %v1527
      %v1560 = vadd.f32 %v1494, %v1528
      %v1561 = vadd.f32 %v1495, %v1529
      %v1562 = vadd.f32 %v1496, %v1530
      %v1563 = vadd.f32 %v1497, %v1531
      %v1564 = vadd.f32 %v1498, %v1532
      %v1565 = vadd.f32 %v1499, %v1533
      %v1566 = vadd.f32 %v1500, %v1534
      %v1567 = vadd.f32 %v1501, %v1535
      %v1568 = vadd.f32 %v1502, %v1536
      %v1569 = vadd.f32 %v1503, %v1537
      %v1570 = vadd.f32 %v1504, %v1538
      %v1571 = vadd.f32 %v1505, %v1539
      %v1572 = vadd.f32 %v1506, %v1540
      %v1573 = vadd.f32 %v1507, %v1541
      %v1574 = vadd.f32 %v1508, %v1542
      %v1575 = vadd.f32 %v1509, %v1543
      %v1576 = vld [vmem:[%s221 + $0x7] sm:$0x1]
      %v1577 = vperm.slane %v1576, 0
      %v1578 = vmul.f32 %v1577, %v360
      %v1579 = vmul.f32 %v1577, %v361
      %v1580 = vmul.f32 %v1577, %v362
      %v1581 = vmul.f32 %v1577, %v363
      %v1582 = vmul.f32 %v1577, %v364
      %v1583 = vmul.f32 %v1577, %v365
      %v1584 = vmul.f32 %v1577, %v366
      %v1585 = vmul.f32 %v1577, %v367
      %v1586 = vmul.f32 %v1577, %v368
      %v1587 = vmul.f32 %v1577, %v369
      %v1588 = vmul.f32 %v1577, %v370
      %v1589 = vmul.f32 %v1577, %v371
      %v1590 = vmul.f32 %v1577, %v372
      %v1591 = vmul.f32 %v1577, %v373
      %v1592 = vmul.f32 %v1577, %v374
      %v1593 = vmul.f32 %v1577, %v375
      %v1594 = vmul.f32 %v1577, %v376
      %v1595 = vmul.f32 %v1577, %v377
      %v1596 = vmul.f32 %v1577, %v378
      %v1597 = vmul.f32 %v1577, %v379
      %v1598 = vmul.f32 %v1577, %v380
      %v1599 = vmul.f32 %v1577, %v381
      %v1600 = vmul.f32 %v1577, %v382
      %v1601 = vmul.f32 %v1577, %v383
      %v1602 = vmul.f32 %v1577, %v384
      %v1603 = vmul.f32 %v1577, %v385
      %v1604 = vmul.f32 %v1577, %v386
      %v1605 = vmul.f32 %v1577, %v387
      %v1606 = vmul.f32 %v1577, %v388
      %v1607 = vmul.f32 %v1577, %v389
      %v1608 = vmul.f32 %v1577, %v390
      %v1609 = vmul.f32 %v1577, %v391
      %v1610 = vmul.f32 %v1577, %v392
      %v1611 = vmul.f32 %v1577, %v393
      %v1612 = vmul.f32 %v1577, %v394
      %v1613 = vmul.f32 %v1577, %v395
      %v1614 = vmul.f32 %v1577, %v396
      %v1615 = vmul.f32 %v1577, %v397
      %v1616 = vmul.f32 %v1577, %v398
      %v1617 = vmul.f32 %v1577, %v399
      %v1618 = vmul.f32 %v1577, %v400
      %v1619 = vmul.f32 %v1577, %v401
      %v1620 = vmul.f32 %v1577, %v402
      %v1621 = vmul.f32 %v1577, %v403
      %v1622 = vmul.f32 %v1577, %v404
      %v1623 = vmul.f32 %v1577, %v405
      %v1624 = vmul.f32 %v1577, %v406
      %v1625 = vmul.f32 %v1577, %v407
      %v1674 = vrot.slane %v1578, 1
      %v1675 = vrot.slane %v1579, 1
      %v1676 = vsel %vm572, %v1674, %v1675
      %v1677 = vrot.slane %v1580, 1
      %v1678 = vsel %vm572, %v1675, %v1677
      %v1679 = vrot.slane %v1581, 1
      %v1680 = vrot.slane %v1582, 1
      %v1681 = vsel %vm572, %v1679, %v1680
      %v1682 = vrot.slane %v1583, 1
      %v1683 = vsel %vm572, %v1680, %v1682
      %v1684 = vrot.slane %v1584, 1
      %v1685 = vrot.slane %v1585, 1
      %v1686 = vsel %vm572, %v1684, %v1685
      %v1687 = vrot.slane %v1586, 1
      %v1688 = vsel %vm572, %v1685, %v1687
      %v1689 = vrot.slane %v1587, 1
      %v1690 = vrot.slane %v1588, 1
      %v1691 = vsel %vm572, %v1689, %v1690
      %v1692 = vrot.slane %v1589, 1
      %v1693 = vsel %vm572, %v1690, %v1692
      %v1694 = vrot.slane %v1590, 1
      %v1695 = vrot.slane %v1591, 1
      %v1696 = vsel %vm572, %v1694, %v1695
      %v1697 = vrot.slane %v1592, 1
      %v1698 = vsel %vm572, %v1695, %v1697
      %v1699 = vrot.slane %v1593, 1
      %v1700 = vrot.slane %v1594, 1
      %v1701 = vsel %vm572, %v1699, %v1700
      %v1702 = vrot.slane %v1595, 1
      %v1703 = vsel %vm572, %v1700, %v1702
      %v1704 = vrot.slane %v1596, 1
      %v1705 = vrot.slane %v1597, 1
      %v1706 = vsel %vm572, %v1704, %v1705
      %v1707 = vrot.slane %v1598, 1
      %v1708 = vsel %vm572, %v1705, %v1707
      %v1709 = vrot.slane %v1599, 1
      %v1710 = vrot.slane %v1600, 1
      %v1711 = vsel %vm572, %v1709, %v1710
      %v1712 = vrot.slane %v1601, 1
      %v1713 = vsel %vm572, %v1710, %v1712
      %v1714 = vrot.slane %v1602, 1
      %v1715 = vrot.slane %v1603, 1
      %v1716 = vsel %vm572, %v1714, %v1715
      %v1717 = vrot.slane %v1604, 1
      %v1718 = vsel %vm572, %v1715, %v1717
      %v1719 = vrot.slane %v1605, 1
      %v1720 = vrot.slane %v1606, 1
      %v1721 = vsel %vm572, %v1719, %v1720
      %v1722 = vrot.slane %v1607, 1
      %v1723 = vsel %vm572, %v1720, %v1722
      %v1724 = vrot.slane %v1608, 1
      %v1725 = vrot.slane %v1609, 1
      %v1726 = vsel %vm572, %v1724, %v1725
      %v1727 = vrot.slane %v1610, 1
      %v1728 = vsel %vm572, %v1725, %v1727
      %v1729 = vrot.slane %v1611, 1
      %v1730 = vrot.slane %v1612, 1
      %v1731 = vsel %vm572, %v1729, %v1730
      %v1732 = vrot.slane %v1613, 1
      %v1733 = vsel %vm572, %v1730, %v1732
      %v1734 = vrot.slane %v1614, 1
      %v1735 = vrot.slane %v1615, 1
      %v1736 = vsel %vm572, %v1734, %v1735
      %v1737 = vrot.slane %v1616, 1
      %v1738 = vsel %vm572, %v1735, %v1737
      %v1739 = vrot.slane %v1617, 1
      %v1740 = vrot.slane %v1618, 1
      %v1741 = vsel %vm572, %v1739, %v1740
      %v1742 = vrot.slane %v1619, 1
      %v1743 = vsel %vm572, %v1740, %v1742
      %v1744 = vrot.slane %v1620, 1
      %v1745 = vrot.slane %v1621, 1
      %v1746 = vsel %vm572, %v1744, %v1745
      %v1747 = vrot.slane %v1622, 1
      %v1748 = vsel %vm572, %v1745, %v1747
      %v1749 = vrot.slane %v1623, 1
      %v1750 = vrot.slane %v1624, 1
      %v1751 = vsel %vm572, %v1749, %v1750
      %v1752 = vrot.slane %v1625, 1
      %v1753 = vsel %vm572, %v1750, %v1752
      %v1786 = vadd.f32 %v1544, %v1676
      %v1787 = vadd.f32 %v1545, %v1678
      %v1788 = vadd.f32 %v1546, %v1681
      %v1789 = vadd.f32 %v1547, %v1683
      %v1790 = vadd.f32 %v1548, %v1686
      %v1791 = vadd.f32 %v1549, %v1688
      %v1792 = vadd.f32 %v1550, %v1691
      %v1793 = vadd.f32 %v1551, %v1693
      %v1794 = vadd.f32 %v1552, %v1696
      %v1795 = vadd.f32 %v1553, %v1698
      %v1796 = vadd.f32 %v1554, %v1701
      %v1797 = vadd.f32 %v1555, %v1703
      %v1798 = vadd.f32 %v1556, %v1706
      %v1799 = vadd.f32 %v1557, %v1708
      %v1800 = vadd.f32 %v1558, %v1711
      %v1801 = vadd.f32 %v1559, %v1713
      %v1802 = vadd.f32 %v1560, %v1716
      %v1803 = vadd.f32 %v1561, %v1718
      %v1804 = vadd.f32 %v1562, %v1721
      %v1805 = vadd.f32 %v1563, %v1723
      %v1806 = vadd.f32 %v1564, %v1726
      %v1807 = vadd.f32 %v1565, %v1728
      %v1808 = vadd.f32 %v1566, %v1731
      %v1809 = vadd.f32 %v1567, %v1733
      %v1810 = vadd.f32 %v1568, %v1736
      %v1811 = vadd.f32 %v1569, %v1738
      %v1812 = vadd.f32 %v1570, %v1741
      %v1813 = vadd.f32 %v1571, %v1743
      %v1814 = vadd.f32 %v1572, %v1746
      %v1815 = vadd.f32 %v1573, %v1748
      %v1816 = vadd.f32 %v1574, %v1751
      %v1817 = vadd.f32 %v1575, %v1753
      %v1818 = vld [vmem:[%s221 + $0x8] sm:$0x1]
      %v1819 = vperm.slane %v1818, 0
      %v1820 = vmul.f32 %v1819, %v360
      %v1821 = vmul.f32 %v1819, %v361
      %v1822 = vmul.f32 %v1819, %v362
      %v1823 = vmul.f32 %v1819, %v363
      %v1824 = vmul.f32 %v1819, %v364
      %v1825 = vmul.f32 %v1819, %v365
      %v1826 = vmul.f32 %v1819, %v366
      %v1827 = vmul.f32 %v1819, %v367
      %v1828 = vmul.f32 %v1819, %v368
      %v1829 = vmul.f32 %v1819, %v369
      %v1830 = vmul.f32 %v1819, %v370
      %v1831 = vmul.f32 %v1819, %v371
      %v1832 = vmul.f32 %v1819, %v372
      %v1833 = vmul.f32 %v1819, %v373
      %v1834 = vmul.f32 %v1819, %v374
      %v1835 = vmul.f32 %v1819, %v375
      %v1836 = vmul.f32 %v1819, %v376
      %v1837 = vmul.f32 %v1819, %v377
      %v1838 = vmul.f32 %v1819, %v378
      %v1839 = vmul.f32 %v1819, %v379
      %v1840 = vmul.f32 %v1819, %v380
      %v1841 = vmul.f32 %v1819, %v381
      %v1842 = vmul.f32 %v1819, %v382
      %v1843 = vmul.f32 %v1819, %v383
      %v1844 = vmul.f32 %v1819, %v384
      %v1845 = vmul.f32 %v1819, %v385
      %v1846 = vmul.f32 %v1819, %v386
      %v1847 = vmul.f32 %v1819, %v387
      %v1848 = vmul.f32 %v1819, %v388
      %v1849 = vmul.f32 %v1819, %v389
      %v1850 = vmul.f32 %v1819, %v390
      %v1851 = vmul.f32 %v1819, %v391
      %v1852 = vmul.f32 %v1819, %v392
      %v1853 = vmul.f32 %v1819, %v393
      %v1854 = vmul.f32 %v1819, %v394
      %v1855 = vmul.f32 %v1819, %v395
      %v1856 = vmul.f32 %v1819, %v396
      %v1857 = vmul.f32 %v1819, %v397
      %v1858 = vmul.f32 %v1819, %v398
      %v1859 = vmul.f32 %v1819, %v399
      %v1860 = vmul.f32 %v1819, %v400
      %v1861 = vmul.f32 %v1819, %v401
      %v1862 = vmul.f32 %v1819, %v402
      %v1863 = vmul.f32 %v1819, %v403
      %v1864 = vmul.f32 %v1819, %v404
      %v1865 = vmul.f32 %v1819, %v405
      %v1866 = vmul.f32 %v1819, %v406
      %v1867 = vmul.f32 %v1819, %v407
      %v1916 = vrot.slane %v1820, 2
      %v1917 = vrot.slane %v1821, 2
      %v1918 = vsel %vm815, %v1916, %v1917
      %v1919 = vrot.slane %v1822, 2
      %v1920 = vsel %vm815, %v1917, %v1919
      %v1921 = vrot.slane %v1823, 2
      %v1922 = vrot.slane %v1824, 2
      %v1923 = vsel %vm815, %v1921, %v1922
      %v1924 = vrot.slane %v1825, 2
      %v1925 = vsel %vm815, %v1922, %v1924
      %v1926 = vrot.slane %v1826, 2
      %v1927 = vrot.slane %v1827, 2
      %v1928 = vsel %vm815, %v1926, %v1927
      %v1929 = vrot.slane %v1828, 2
      %v1930 = vsel %vm815, %v1927, %v1929
      %v1931 = vrot.slane %v1829, 2
      %v1932 = vrot.slane %v1830, 2
      %v1933 = vsel %vm815, %v1931, %v1932
      %v1934 = vrot.slane %v1831, 2
      %v1935 = vsel %vm815, %v1932, %v1934
      %v1936 = vrot.slane %v1832, 2
      %v1937 = vrot.slane %v1833, 2
      %v1938 = vsel %vm815, %v1936, %v1937
      %v1939 = vrot.slane %v1834, 2
      %v1940 = vsel %vm815, %v1937, %v1939
      %v1941 = vrot.slane %v1835, 2
      %v1942 = vrot.slane %v1836, 2
      %v1943 = vsel %vm815, %v1941, %v1942
      %v1944 = vrot.slane %v1837, 2
      %v1945 = vsel %vm815, %v1942, %v1944
      %v1946 = vrot.slane %v1838, 2
      %v1947 = vrot.slane %v1839, 2
      %v1948 = vsel %vm815, %v1946, %v1947
      %v1949 = vrot.slane %v1840, 2
      %v1950 = vsel %vm815, %v1947, %v1949
      %v1951 = vrot.slane %v1841, 2
      %v1952 = vrot.slane %v1842, 2
      %v1953 = vsel %vm815, %v1951, %v1952
      %v1954 = vrot.slane %v1843, 2
      %v1955 = vsel %vm815, %v1952, %v1954
      %v1956 = vrot.slane %v1844, 2
      %v1957 = vrot.slane %v1845, 2
      %v1958 = vsel %vm815, %v1956, %v1957
      %v1959 = vrot.slane %v1846, 2
      %v1960 = vsel %vm815, %v1957, %v1959
      %v1961 = vrot.slane %v1847, 2
      %v1962 = vrot.slane %v1848, 2
      %v1963 = vsel %vm815, %v1961, %v1962
      %v1964 = vrot.slane %v1849, 2
      %v1965 = vsel %vm815, %v1962, %v1964
      %v1966 = vrot.slane %v1850, 2
      %v1967 = vrot.slane %v1851, 2
      %v1968 = vsel %vm815, %v1966, %v1967
      %v1969 = vrot.slane %v1852, 2
      %v1970 = vsel %vm815, %v1967, %v1969
      %v1971 = vrot.slane %v1853, 2
      %v1972 = vrot.slane %v1854, 2
      %v1973 = vsel %vm815, %v1971, %v1972
      %v1974 = vrot.slane %v1855, 2
      %v1975 = vsel %vm815, %v1972, %v1974
      %v1976 = vrot.slane %v1856, 2
      %v1977 = vrot.slane %v1857, 2
      %v1978 = vsel %vm815, %v1976, %v1977
      %v1979 = vrot.slane %v1858, 2
      %v1980 = vsel %vm815, %v1977, %v1979
      %v1981 = vrot.slane %v1859, 2
      %v1982 = vrot.slane %v1860, 2
      %v1983 = vsel %vm815, %v1981, %v1982
      %v1984 = vrot.slane %v1861, 2
      %v1985 = vsel %vm815, %v1982, %v1984
      %v1986 = vrot.slane %v1862, 2
      %v1987 = vrot.slane %v1863, 2
      %v1988 = vsel %vm815, %v1986, %v1987
      %v1989 = vrot.slane %v1864, 2
      %v1990 = vsel %vm815, %v1987, %v1989
      %v1991 = vrot.slane %v1865, 2
      %v1992 = vrot.slane %v1866, 2
      %v1993 = vsel %vm815, %v1991, %v1992
      %v1994 = vrot.slane %v1867, 2
      %v1995 = vsel %vm815, %v1992, %v1994
      %v2028 = vadd.f32 %v1786, %v1918
      %v2029 = vadd.f32 %v1787, %v1920
      %v2030 = vadd.f32 %v1788, %v1923
      %v2031 = vadd.f32 %v1789, %v1925
      %v2032 = vadd.f32 %v1790, %v1928
      %v2033 = vadd.f32 %v1791, %v1930
      %v2034 = vadd.f32 %v1792, %v1933
      %v2035 = vadd.f32 %v1793, %v1935
      %v2036 = vadd.f32 %v1794, %v1938
      %v2037 = vadd.f32 %v1795, %v1940
      %v2038 = vadd.f32 %v1796, %v1943
      %v2039 = vadd.f32 %v1797, %v1945
      %v2040 = vadd.f32 %v1798, %v1948
      %v2041 = vadd.f32 %v1799, %v1950
      %v2042 = vadd.f32 %v1800, %v1953
      %v2043 = vadd.f32 %v1801, %v1955
      %v2044 = vadd.f32 %v1802, %v1958
      %v2045 = vadd.f32 %v1803, %v1960
      %v2046 = vadd.f32 %v1804, %v1963
      %v2047 = vadd.f32 %v1805, %v1965
      %v2048 = vadd.f32 %v1806, %v1968
      %v2049 = vadd.f32 %v1807, %v1970
      %v2050 = vadd.f32 %v1808, %v1973
      %v2051 = vadd.f32 %v1809, %v1975
      %v2052 = vadd.f32 %v1810, %v1978
      %v2053 = vadd.f32 %v1811, %v1980
      %v2054 = vadd.f32 %v1812, %v1983
      %v2055 = vadd.f32 %v1813, %v1985
      %v2056 = vadd.f32 %v1814, %v1988
      %v2057 = vadd.f32 %v1815, %v1990
      %v2058 = vadd.f32 %v1816, %v1993
      %v2059 = vadd.f32 %v1817, %v1995
      %v2060 = vld [vmem:[%s224] sm:$0x1]
      %v2062 = vperm.slane %v2060, 0
      %v2064 = vadd.f32 %v2028, %v2062
      %v2065 = vadd.f32 %v2029, %v2062
      %v2066 = vadd.f32 %v2030, %v2062
      %v2067 = vadd.f32 %v2031, %v2062
      %v2068 = vadd.f32 %v2032, %v2062
      %v2069 = vadd.f32 %v2033, %v2062
      %v2070 = vadd.f32 %v2034, %v2062
      %v2071 = vadd.f32 %v2035, %v2062
      %v2072 = vadd.f32 %v2036, %v2062
      %v2073 = vadd.f32 %v2037, %v2062
      %v2074 = vadd.f32 %v2038, %v2062
      %v2075 = vadd.f32 %v2039, %v2062
      %v2076 = vadd.f32 %v2040, %v2062
      %v2077 = vadd.f32 %v2041, %v2062
      %v2078 = vadd.f32 %v2042, %v2062
      %v2079 = vadd.f32 %v2043, %v2062
      %v2080 = vadd.f32 %v2044, %v2062
      %v2081 = vadd.f32 %v2045, %v2062
      %v2082 = vadd.f32 %v2046, %v2062
      %v2083 = vadd.f32 %v2047, %v2062
      %v2084 = vadd.f32 %v2048, %v2062
      %v2085 = vadd.f32 %v2049, %v2062
      %v2086 = vadd.f32 %v2050, %v2062
      %v2087 = vadd.f32 %v2051, %v2062
      %v2088 = vadd.f32 %v2052, %v2062
      %v2089 = vadd.f32 %v2053, %v2062
      %v2090 = vadd.f32 %v2054, %v2062
      %v2091 = vadd.f32 %v2055, %v2062
      %v2092 = vadd.f32 %v2056, %v2062
      %v2093 = vadd.f32 %v2057, %v2062
      %v2094 = vadd.f32 %v2058, %v2062
      %v2095 = vadd.f32 %v2059, %v2062
      %v2096 = vmax.f32 %v2064, 0.0
      %v2097 = vmax.f32 %v2065, 0.0
      %v2098 = vmax.f32 %v2066, 0.0
      %v2099 = vmax.f32 %v2067, 0.0
      %v2100 = vmax.f32 %v2068, 0.0
      %v2101 = vmax.f32 %v2069, 0.0
      %v2102 = vmax.f32 %v2070, 0.0
      %v2103 = vmax.f32 %v2071, 0.0
      %v2104 = vmax.f32 %v2072, 0.0
      %v2105 = vmax.f32 %v2073, 0.0
      %v2106 = vmax.f32 %v2074, 0.0
      %v2107 = vmax.f32 %v2075, 0.0
      %v2108 = vmax.f32 %v2076, 0.0
      %v2109 = vmax.f32 %v2077, 0.0
      %v2110 = vmax.f32 %v2078, 0.0
      %v2111 = vmax.f32 %v2079, 0.0
      %v2112 = vmax.f32 %v2080, 0.0
      %v2113 = vmax.f32 %v2081, 0.0
      %v2114 = vmax.f32 %v2082, 0.0
      %v2115 = vmax.f32 %v2083, 0.0
      %v2116 = vmax.f32 %v2084, 0.0
      %v2117 = vmax.f32 %v2085, 0.0
      %v2118 = vmax.f32 %v2086, 0.0
      %v2119 = vmax.f32 %v2087, 0.0
      %v2120 = vmax.f32 %v2088, 0.0
      %v2121 = vmax.f32 %v2089, 0.0
      %v2122 = vmax.f32 %v2090, 0.0
      %v2123 = vmax.f32 %v2091, 0.0
      %v2124 = vmax.f32 %v2092, 0.0
      %v2125 = vmax.f32 %v2093, 0.0
      %v2126 = vmax.f32 %v2094, 0.0
      %v2127 = vmax.f32 %v2095, 0.0
      %2128 = vst.msk [vmem:[%s232] sm:$0xff] %vm233, %v2096
      %2129 = vst.msk [vmem:[%s232 + $0x8] sm:$0xff] %vm233, %v2097
      %2130 = vst.msk [vmem:[%s232 + $0x10] sm:$0xff] %vm233, %v2098
      %2131 = vst.msk [vmem:[%s232 + $0x18] sm:$0xff] %vm233, %v2099
      %2132 = vst.msk [vmem:[%s232 + $0x20] sm:$0xff] %vm233, %v2100
      %2133 = vst.msk [vmem:[%s232 + $0x28] sm:$0xff] %vm233, %v2101
      %2134 = vst.msk [vmem:[%s232 + $0x30] sm:$0xff] %vm233, %v2102
      %2135 = vst.msk [vmem:[%s232 + $0x38] sm:$0xff] %vm233, %v2103
      %2136 = vst.msk [vmem:[%s232 + $0x40] sm:$0xff] %vm233, %v2104
      %2137 = vst.msk [vmem:[%s232 + $0x48] sm:$0xff] %vm233, %v2105
      %2138 = vst.msk [vmem:[%s232 + $0x50] sm:$0xff] %vm233, %v2106
      %2139 = vst.msk [vmem:[%s232 + $0x58] sm:$0xff] %vm233, %v2107
      %2140 = vst.msk [vmem:[%s232 + $0x60] sm:$0xff] %vm233, %v2108
      %2141 = vst.msk [vmem:[%s232 + $0x68] sm:$0xff] %vm233, %v2109
      %2142 = vst.msk [vmem:[%s232 + $0x70] sm:$0xff] %vm233, %v2110
      %2143 = vst.msk [vmem:[%s232 + $0x78] sm:$0xff] %vm233, %v2111
      %2144 = vst.msk [vmem:[%s232 + $0x80] sm:$0xff] %vm233, %v2112
      %2145 = vst.msk [vmem:[%s232 + $0x88] sm:$0xff] %vm233, %v2113
      %2146 = vst.msk [vmem:[%s232 + $0x90] sm:$0xff] %vm233, %v2114
      %2147 = vst.msk [vmem:[%s232 + $0x98] sm:$0xff] %vm233, %v2115
      %2148 = vst.msk [vmem:[%s232 + $0xa0] sm:$0xff] %vm233, %v2116
      %2149 = vst.msk [vmem:[%s232 + $0xa8] sm:$0xff] %vm233, %v2117
      %2150 = vst.msk [vmem:[%s232 + $0xb0] sm:$0xff] %vm233, %v2118
      %2151 = vst.msk [vmem:[%s232 + $0xb8] sm:$0xff] %vm233, %v2119
      %2152 = vst.msk [vmem:[%s232 + $0xc0] sm:$0xff] %vm233, %v2120
      %2153 = vst.msk [vmem:[%s232 + $0xc8] sm:$0xff] %vm233, %v2121
      %2154 = vst.msk [vmem:[%s232 + $0xd0] sm:$0xff] %vm233, %v2122
      %2155 = vst.msk [vmem:[%s232 + $0xd8] sm:$0xff] %vm233, %v2123
      %2156 = vst.msk [vmem:[%s232 + $0xe0] sm:$0xff] %vm233, %v2124
      %2157 = vst.msk [vmem:[%s232 + $0xe8] sm:$0xff] %vm233, %v2125
      %2158 = vst.msk [vmem:[%s232 + $0xf0] sm:$0xff] %vm233, %v2126
      %2159 = vst.msk [vmem:[%s232 + $0xf8] sm:$0xff] %vm233, %v2127
      %p2160 = scmp.lt.s32.totalorder %s18, 1
      %s2161 = scalar_select %p2160, %s18, 1
      %p2162 = scmp.lt.s32.totalorder %s19, 0
      %s2163 = scalar_select %p2162, %s19, 0
      %s2164 = smul.addr %s2161, 32
      %s2165 = sadd.s32 %s2163, %s2164
      %s2166 = smul.addr %s2165, 8
      %s2167 = scalar_lea.vmem %s3, %s2166
      // Predicated region
      $region33: #{tpu_custom_call.1} parent=31 // pred_check
        %p2168 = pneg %p126
      $region34: #{tpu_custom_call.1} parent=31 // pred_check_branch
        %2170 = sbr.rel (%p2168) target = $region36
      $region35: #{tpu_custom_call.1} parent=31 // pred_region
        _
      $region36: #{tpu_custom_call.1} parent=31 // pred_fallthru
        _
    $region32: #{tpu_custom_call.1} parent=5 // pred_fallthru
      _
    %p2171 = scmp.le.s32.totalorder 2, %s9
    // Predicated region
    $region37: #{tpu_custom_call.1} parent=5 // pred_check
      %p2172 = pneg %p2171
    $region38: #{tpu_custom_call.1} parent=5 // pred_check_branch
      %2174 = sbr.rel (%p2172) target = $region40
    $region39: #{tpu_custom_call.1} parent=5 // pred_region
      %s2175 = ssub.s32 %s9, 2
      // Predicated region
      $region41: #{tpu_custom_call.1} parent=39 // pred_check
        %p2176 = pneg %p132
      $region42: #{tpu_custom_call.1} parent=39 // pred_check_branch
        %2178 = sbr.rel (%p2176) target = $region44
      $region43: #{tpu_custom_call.1} parent=39 // pred_region
        %p2179 = scmp.lt.s32.totalorder %s20, 1
        %s2180 = scalar_select %p2179, %s20, 1
        %p2181 = scmp.lt.s32.totalorder %s21, 0
        %s2182 = scalar_select %p2181, %s21, 0
        %s2183 = smul.addr %s2180, 32
        %s2184 = sadd.s32 %s2182, %s2183
        %s2185 = smul.addr %s2184, 8
        %s2186 = scalar_lea.vmem %s3, %s2185
      $region44: #{tpu_custom_call.1} parent=39 // pred_fallthru
        _
    $region40: #{tpu_custom_call.1} parent=5 // pred_fallthru
      _
  $region6: #{tpu_custom_call.1} parent=0 // loop_footer
    %s13 = sadd.s32 1, %s9
  $region7: #{tpu_custom_call.1} parent=0 // loop_footer_branch
    %8 = sbr.rel target = $region3
  $region8: #{tpu_custom_call.1} parent=0 // loop_exit
    _

</llo_original>
